<compile_context>
chip_gen: v7x
topology: tpu7x:2x2x1
jax: 0.10.0
libtpu: 0.0.40
codegen_flags: <defaults>
</compile_context>

<pallas_src>
import jax
import jax.numpy as jnp
from jax.experimental import pallas as pl
from jax.experimental.pallas import tpu as pltpu


def gru_cell_kernel(g_ref, xh_ref, h_ref, w1_ref, w2_ref, b_ref, out_ref):
    K = g_ref.shape[0]
    Bblk, N, _ = xh_ref.shape
    H = h_ref.shape[2]
    P1 = w1_ref.shape[1] // K          # padded columns per k (stage 1)
    P2 = w2_ref.shape[1] // K          # padded columns per k (stage 2)

    # Hoist invariant operands out of the (unrolled) batch loop.
    w1 = w1_ref[...]                   # [C+H, K*P1]
    w2 = w2_ref[...]                   # [H,   K*P2]
    bias = b_ref[...]                  # [1, P1]  = [bz | br | bn | 0]
    gks = [g_ref[k] for k in range(K)]  # K x [N, N]

    for b in range(Bblk):
        xh = xh_ref[b]                 # [N, C+H]
        h = h_ref[b]                   # [N, H]

        # ---- stage 1: gate GCN (+ x-part of candidate GCN) -----------------
        # one lane-dense matmul, then K small G[k] matmuls on 128-aligned slices
        s1 = jnp.dot(xh, w1, preferred_element_type=jnp.float32)   # [N, K*P1]
        acc = jnp.zeros((N, P1), jnp.float32)
        for k in range(K):
            acc = acc + jnp.dot(gks[k], s1[:, k * P1:(k + 1) * P1],
                                preferred_element_type=jnp.float32)
        acc = acc + bias

        z = jax.nn.sigmoid(acc[:, 0:H])
        r = jax.nn.sigmoid(acc[:, H:2 * H])
        nx = acc[:, 2 * H:3 * H]       # x-contribution of candidate (+ bias)

        # ---- stage 2: candidate GCN h-part (uses r * h) ---------------------
        rh = r * h
        s2 = jnp.dot(rh, w2, preferred_element_type=jnp.float32)   # [N, K*P2]
        acc2 = jnp.zeros((N, P2), jnp.float32)
        for k in range(K):
            acc2 = acc2 + jnp.dot(gks[k], s2[:, k * P2:(k + 1) * P2],
                                  preferred_element_type=jnp.float32)

        n = jnp.tanh(nx + acc2[:, 0:H])
        out_ref[b] = z * n + (1.0 - z) * h


def gru_cell_pallas(G, x_t, h_pre, W_gate, b_gate, W_update, b_update):
    K, N, _ = G.shape
    B, _, C = x_t.shape
    H = h_pre.shape[-1]
    F = C + H
    LANE = 128
    P1 = ((3 * H + LANE - 1) // LANE) * LANE
    P2 = ((H + LANE - 1) // LANE) * LANE

    # --- pack weights (wrapper-side, matches the reference concat ordering) ---
    Wg = W_gate.reshape(K, F, 2 * H)          # gate:      per-k [C+H, 2H]
    Wu = W_update.reshape(K, F, H)            # candidate: per-k [C+H, H]

    # Stage-1 block per k: [Wz | Wr | Wn_x (h-rows zeroed)], zero-padded to P1 cols.
    wn_x_full = jnp.concatenate(
        [Wu[:, :C, :], jnp.zeros((K, H, H), W_update.dtype)], axis=1)   # [K, F, H]
    W1 = jnp.concatenate([Wg, wn_x_full], axis=-1)                      # [K, F, 3H]
    W1 = jnp.pad(W1, ((0, 0), (0, 0), (0, P1 - 3 * H)))                 # [K, F, P1]
    W1 = jnp.transpose(W1, (1, 0, 2)).reshape(F, K * P1)                # [F, K*P1]

    # Stage-2 block per k: Wn_h, zero-padded to P2 cols.
    W2 = jnp.pad(Wu[:, C:, :], ((0, 0), (0, 0), (0, P2 - H)))           # [K, H, P2]
    W2 = jnp.transpose(W2, (1, 0, 2)).reshape(H, K * P2)                # [H, K*P2]

    # Packed bias, aligned with the stage-1 accumulator columns.
    bias = jnp.zeros((1, P1), jnp.float32)
    bias = bias.at[0, :2 * H].set(b_gate.astype(jnp.float32))
    bias = bias.at[0, 2 * H:3 * H].set(b_update.astype(jnp.float32))

    # Single concat of [x | h]; h_pre is also passed separately (needed for the
    # r*h term and the final blend).
    xh = jnp.concatenate([x_t, h_pre], axis=-1)                         # [B, N, F]

    # --- grid choice: batch-parallel only where it pays off (2-TC chips) ------
    try:
        kind = jax.devices()[0].device_kind.lower()
    except Exception:  # pragma: no cover
        kind = ""
    two_tc = "v7" in kind
    bb = 1 if (two_tc and B >= 2 and B % 2 == 0) else B   # batch block size
    grid = (B // bb,)

    batch3 = lambda shape: pl.BlockSpec(shape, lambda i: (i, 0, 0))
    const3 = lambda shape: pl.BlockSpec(shape, lambda i: (0, 0, 0))
    const2 = lambda shape: pl.BlockSpec(shape, lambda i: (0, 0))

    return pl.pallas_call(
        gru_cell_kernel,
        out_shape=jax.ShapeDtypeStruct((B, N, H), jnp.float32),
        grid=grid,
        in_specs=[
            const3((K, N, N)),                 # G
            batch3((bb, N, F)),                # [x | h]
            batch3((bb, N, H)),                # h_pre
            const2((F, K * P1)),               # packed stage-1 weights
            const2((H, K * P2)),               # packed stage-2 weights
            const2((1, P1)),                   # packed bias
        ],
        out_specs=pl.BlockSpec((bb, N, H), lambda i: (i, 0, 0)),
        compiler_params=pltpu.CompilerParams(
            dimension_semantics=("parallel",)),
    )(G, xh, h_pre, W1, W2, bias)


# ----------------------- pure-JAX reference (matches PyTorch) -----------------------
def gcn_ref(G, x, W, b):
    K = G.shape[0]
    supports = [jnp.einsum('ij,bjp->bip', G[k], x) for k in range(K)]
    support_cat = jnp.concatenate(supports, axis=-1)
    return jnp.einsum('bip,pq->biq', support_cat, W) + b


def gru_cell_ref(G, x_t, h_pre, W_gate, b_gate, W_update, b_update, H):
    combined = jnp.concatenate([x_t, h_pre], axis=-1)
    z_r = jax.nn.sigmoid(gcn_ref(G, combined, W_gate, b_gate))
    z, r = z_r[..., :H], z_r[..., H:]
    candidate = jnp.concatenate([x_t, r * h_pre], axis=-1)
    n = jnp.tanh(gcn_ref(G, candidate, W_update, b_update))
    return z * n + (1.0 - z) * h_pre


if __name__ == "__main__":
    B, N, C, H, K = 2, 16, 4, 32, 3

    key = jax.random.PRNGKey(0)
    k_g, k_x, k_h, k_wg, k_wu = jax.random.split(key, 5)

    G = jax.random.normal(k_g, (K, N, N), jnp.float32)
    x_t = jax.random.normal(k_x, (B, N, C), jnp.float32)
    h_pre = jax.random.normal(k_h, (B, N, H), jnp.float32)

    # Deterministic xavier-normal-style init for the two GCN weights; zero biases.
    fan_in = K * (C + H)
    std_g = (2.0 / (fan_in + 2 * H)) ** 0.5
    std_u = (2.0 / (fan_in + H)) ** 0.5
    W_gate = std_g * jax.random.normal(k_wg, (fan_in, 2 * H), jnp.float32)
    b_gate = jnp.zeros((2 * H,), jnp.float32)
    W_update = std_u * jax.random.normal(k_wu, (fan_in, H), jnp.float32)
    b_update = jnp.zeros((H,), jnp.float32)

    h_t = gru_cell_pallas(G, x_t, h_pre, W_gate, b_gate, W_update, b_update)
    h_t = jax.block_until_ready(h_t)

    h_ref = gru_cell_ref(G, x_t, h_pre, W_gate, b_gate, W_update, b_update, H)
    assert h_t.shape == (B, N, H)
    assert jnp.allclose(h_t, h_ref, rtol=1e-4, atol=1e-4), "mismatch vs reference"

    print("KERNEL_OK")
</pallas_src>

<mosaic_0001>
module attributes {stable_mosaic.version = 11 : i64} {
  func.func @gru_cell_kernel(%arg0: i32, %arg1: memref<3x16x16xf32, #tpu.memory_space<vmem>>, %arg2: memref<2x16x36xf32, #tpu.memory_space<vmem>>, %arg3: memref<2x16x32xf32, #tpu.memory_space<vmem>>, %arg4: memref<36x384xf32, #tpu.memory_space<vmem>>, %arg5: memref<32x384xf32, #tpu.memory_space<vmem>>, %arg6: memref<1x128xf32, #tpu.memory_space<vmem>>, %arg7: memref<2x16x32xf32, #tpu.memory_space<vmem>>) attributes {dimension_semantics = [#tpu.dimension_semantics<parallel>], iteration_bounds = array<i64: 1>, scalar_prefetch = 0 : i64, scratch_operands = 0 : i64, tpu.core_type = #tpu.core_type<tc>, window_params = [{pipeline_mode = #tpu.pipeline_mode<synchronous>, transform_indices = @transform_0, window_bounds = array<i64: 3, 16, 16>}, {transform_indices = @transform_1, window_bounds = array<i64: 2, 16, 36>}, {transform_indices = @transform_2, window_bounds = array<i64: 2, 16, 32>}, {pipeline_mode = #tpu.pipeline_mode<synchronous>, transform_indices = @transform_3, window_bounds = array<i64: 36, 384>}, {pipeline_mode = #tpu.pipeline_mode<synchronous>, transform_indices = @transform_4, window_bounds = array<i64: 32, 384>}, {pipeline_mode = #tpu.pipeline_mode<synchronous>, transform_indices = @transform_5, window_bounds = array<i64: 1, 128>}, {transform_indices = @transform_6, window_bounds = array<i64: 2, 16, 32>}]} {
    %c0 = arith.constant 0 : index
    %c0_0 = arith.constant 0 : index
    %0 = vector.load %arg4[%c0, %c0_0] : memref<36x384xf32, #tpu.memory_space<vmem>>, vector<36x384xf32>
    %c0_1 = arith.constant 0 : index
    %c0_2 = arith.constant 0 : index
    %1 = vector.load %arg5[%c0_1, %c0_2] : memref<32x384xf32, #tpu.memory_space<vmem>>, vector<32x384xf32>
    %c0_3 = arith.constant 0 : index
    %c0_4 = arith.constant 0 : index
    %2 = vector.load %arg6[%c0_3, %c0_4] : memref<1x128xf32, #tpu.memory_space<vmem>>, vector<1x128xf32>
    %c0_5 = arith.constant 0 : index
    %c0_6 = arith.constant 0 : index
    %c0_7 = arith.constant 0 : index
    %3 = vector.load %arg1[%c0_5, %c0_6, %c0_7] : memref<3x16x16xf32, #tpu.memory_space<vmem>>, vector<1x16x16xf32>
    %4 = vector.shape_cast %3 : vector<1x16x16xf32> to vector<16x16xf32>
    %c1 = arith.constant 1 : index
    %c0_8 = arith.constant 0 : index
    %c0_9 = arith.constant 0 : index
    %5 = vector.load %arg1[%c1, %c0_8, %c0_9] : memref<3x16x16xf32, #tpu.memory_space<vmem>>, vector<1x16x16xf32>
    %6 = vector.shape_cast %5 : vector<1x16x16xf32> to vector<16x16xf32>
    %c2 = arith.constant 2 : index
    %c0_10 = arith.constant 0 : index
    %c0_11 = arith.constant 0 : index
    %7 = vector.load %arg1[%c2, %c0_10, %c0_11] : memref<3x16x16xf32, #tpu.memory_space<vmem>>, vector<1x16x16xf32>
    %8 = vector.shape_cast %7 : vector<1x16x16xf32> to vector<16x16xf32>
    %c0_12 = arith.constant 0 : index
    %c0_13 = arith.constant 0 : index
    %c0_14 = arith.constant 0 : index
    %9 = vector.load %arg2[%c0_12, %c0_13, %c0_14] : memref<2x16x36xf32, #tpu.memory_space<vmem>>, vector<1x16x36xf32>
    %10 = vector.shape_cast %9 : vector<1x16x36xf32> to vector<16x36xf32>
    %c0_15 = arith.constant 0 : index
    %c0_16 = arith.constant 0 : index
    %c0_17 = arith.constant 0 : index
    %11 = vector.load %arg3[%c0_15, %c0_16, %c0_17] : memref<2x16x32xf32, #tpu.memory_space<vmem>>, vector<1x16x32xf32>
    %12 = vector.shape_cast %11 : vector<1x16x32xf32> to vector<16x32xf32>
    %cst = arith.constant dense<0.000000e+00> : vector<16x384xf32>
    %13 = tpu.matmul %10, %0, %cst {dimension_numbers = #tpu.dot_dimension_numbers<[1], [0], [0], [1], [0, 0, 1, 1], [], []>} : vector<16x36xf32>, vector<36x384xf32>, vector<16x384xf32> -> vector<16x384xf32>
    %cst_18 = arith.constant 0.000000e+00 : f32
    %14 = vector.broadcast %cst_18 : f32 to vector<16x128xf32>
    %15 = vector.extract_strided_slice %13 {offsets = [0, 0], sizes = [16, 128], strides = [1, 1]} : vector<16x384xf32> to vector<16x128xf32>
    %cst_19 = arith.constant dense<0.000000e+00> : vector<16x128xf32>
    %16 = tpu.matmul %4, %15, %cst_19 {dimension_numbers = #tpu.dot_dimension_numbers<[1], [0], [0], [1], [0, 0, 1, 1], [], []>} : vector<16x16xf32>, vector<16x128xf32>, vector<16x128xf32> -> vector<16x128xf32>
    %17 = arith.addf %14, %16 : vector<16x128xf32>
    %18 = vector.extract_strided_slice %13 {offsets = [0, 128], sizes = [16, 128], strides = [1, 1]} : vector<16x384xf32> to vector<16x128xf32>
    %cst_20 = arith.constant dense<0.000000e+00> : vector<16x128xf32>
    %19 = tpu.matmul %6, %18, %cst_20 {dimension_numbers = #tpu.dot_dimension_numbers<[1], [0], [0], [1], [0, 0, 1, 1], [], []>} : vector<16x16xf32>, vector<16x128xf32>, vector<16x128xf32> -> vector<16x128xf32>
    %20 = arith.addf %17, %19 : vector<16x128xf32>
    %21 = vector.extract_strided_slice %13 {offsets = [0, 256], sizes = [16, 128], strides = [1, 1]} : vector<16x384xf32> to vector<16x128xf32>
    %cst_21 = arith.constant dense<0.000000e+00> : vector<16x128xf32>
    %22 = tpu.matmul %8, %21, %cst_21 {dimension_numbers = #tpu.dot_dimension_numbers<[1], [0], [0], [1], [0, 0, 1, 1], [], []>} : vector<16x16xf32>, vector<16x128xf32>, vector<16x128xf32> -> vector<16x128xf32>
    %23 = arith.addf %20, %22 : vector<16x128xf32>
    %24 = vector.broadcast %2 : vector<1x128xf32> to vector<16x128xf32>
    %25 = arith.addf %23, %24 : vector<16x128xf32>
    %26 = vector.extract_strided_slice %25 {offsets = [0, 0], sizes = [16, 32], strides = [1, 1]} : vector<16x128xf32> to vector<16x32xf32>
    %27 = arith.negf %26 : vector<16x32xf32>
    %28 = math.exp %27 : vector<16x32xf32>
    %cst_22 = arith.constant 1.000000e+00 : f32
    %29 = vector.broadcast %cst_22 : f32 to vector<16x32xf32>
    %30 = arith.addf %29, %28 : vector<16x32xf32>
    %31 = arith.divf %29, %30 : vector<16x32xf32>
    %32 = vector.extract_strided_slice %25 {offsets = [0, 32], sizes = [16, 32], strides = [1, 1]} : vector<16x128xf32> to vector<16x32xf32>
    %33 = arith.negf %32 : vector<16x32xf32>
    %34 = math.exp %33 : vector<16x32xf32>
    %cst_23 = arith.constant 1.000000e+00 : f32
    %35 = vector.broadcast %cst_23 : f32 to vector<16x32xf32>
    %36 = arith.addf %35, %34 : vector<16x32xf32>
    %37 = arith.divf %35, %36 : vector<16x32xf32>
    %38 = vector.extract_strided_slice %25 {offsets = [0, 64], sizes = [16, 32], strides = [1, 1]} : vector<16x128xf32> to vector<16x32xf32>
    %39 = arith.mulf %37, %12 : vector<16x32xf32>
    %cst_24 = arith.constant dense<0.000000e+00> : vector<16x384xf32>
    %40 = tpu.matmul %39, %1, %cst_24 {dimension_numbers = #tpu.dot_dimension_numbers<[1], [0], [0], [1], [0, 0, 1, 1], [], []>} : vector<16x32xf32>, vector<32x384xf32>, vector<16x384xf32> -> vector<16x384xf32>
    %cst_25 = arith.constant 0.000000e+00 : f32
    %41 = vector.broadcast %cst_25 : f32 to vector<16x128xf32>
    %42 = vector.extract_strided_slice %40 {offsets = [0, 0], sizes = [16, 128], strides = [1, 1]} : vector<16x384xf32> to vector<16x128xf32>
    %cst_26 = arith.constant dense<0.000000e+00> : vector<16x128xf32>
    %43 = tpu.matmul %4, %42, %cst_26 {dimension_numbers = #tpu.dot_dimension_numbers<[1], [0], [0], [1], [0, 0, 1, 1], [], []>} : vector<16x16xf32>, vector<16x128xf32>, vector<16x128xf32> -> vector<16x128xf32>
    %44 = arith.addf %41, %43 : vector<16x128xf32>
    %45 = vector.extract_strided_slice %40 {offsets = [0, 128], sizes = [16, 128], strides = [1, 1]} : vector<16x384xf32> to vector<16x128xf32>
    %cst_27 = arith.constant dense<0.000000e+00> : vector<16x128xf32>
    %46 = tpu.matmul %6, %45, %cst_27 {dimension_numbers = #tpu.dot_dimension_numbers<[1], [0], [0], [1], [0, 0, 1, 1], [], []>} : vector<16x16xf32>, vector<16x128xf32>, vector<16x128xf32> -> vector<16x128xf32>
    %47 = arith.addf %44, %46 : vector<16x128xf32>
    %48 = vector.extract_strided_slice %40 {offsets = [0, 256], sizes = [16, 128], strides = [1, 1]} : vector<16x384xf32> to vector<16x128xf32>
    %cst_28 = arith.constant dense<0.000000e+00> : vector<16x128xf32>
    %49 = tpu.matmul %8, %48, %cst_28 {dimension_numbers = #tpu.dot_dimension_numbers<[1], [0], [0], [1], [0, 0, 1, 1], [], []>} : vector<16x16xf32>, vector<16x128xf32>, vector<16x128xf32> -> vector<16x128xf32>
    %50 = arith.addf %47, %49 : vector<16x128xf32>
    %51 = vector.extract_strided_slice %50 {offsets = [0, 0], sizes = [16, 32], strides = [1, 1]} : vector<16x128xf32> to vector<16x32xf32>
    %52 = arith.addf %38, %51 : vector<16x32xf32>
    %53 = math.tanh %52 : vector<16x32xf32>
    %54 = arith.mulf %31, %53 : vector<16x32xf32>
    %cst_29 = arith.constant 1.000000e+00 : f32
    %55 = vector.broadcast %cst_29 : f32 to vector<16x32xf32>
    %56 = arith.subf %55, %31 : vector<16x32xf32>
    %57 = arith.mulf %56, %12 : vector<16x32xf32>
    %58 = arith.addf %54, %57 : vector<16x32xf32>
    %c0_30 = arith.constant 0 : index
    %c0_31 = arith.constant 0 : index
    %c0_32 = arith.constant 0 : index
    %59 = vector.load %arg7[%c0_30, %c0_31, %c0_32] : memref<2x16x32xf32, #tpu.memory_space<vmem>>, vector<1x16x32xf32>
    %60 = vector.shape_cast %59 : vector<1x16x32xf32> to vector<16x32xf32>
    %61 = vector.shape_cast %58 : vector<16x32xf32> to vector<1x16x32xf32>
    tpu.vector_store %arg7[%c0_30, %c0_31, %c0_32], %61 {strides = array<i32>} : memref<2x16x32xf32, #tpu.memory_space<vmem>>, vector<1x16x32xf32>,
    %c1_33 = arith.constant 1 : index
    %c0_34 = arith.constant 0 : index
    %c0_35 = arith.constant 0 : index
    %62 = vector.load %arg2[%c1_33, %c0_34, %c0_35] : memref<2x16x36xf32, #tpu.memory_space<vmem>>, vector<1x16x36xf32>
    %63 = vector.shape_cast %62 : vector<1x16x36xf32> to vector<16x36xf32>
    %c1_36 = arith.constant 1 : index
    %c0_37 = arith.constant 0 : index
    %c0_38 = arith.constant 0 : index
    %64 = vector.load %arg3[%c1_36, %c0_37, %c0_38] : memref<2x16x32xf32, #tpu.memory_space<vmem>>, vector<1x16x32xf32>
    %65 = vector.shape_cast %64 : vector<1x16x32xf32> to vector<16x32xf32>
    %cst_39 = arith.constant dense<0.000000e+00> : vector<16x384xf32>
    %66 = tpu.matmul %63, %0, %cst_39 {dimension_numbers = #tpu.dot_dimension_numbers<[1], [0], [0], [1], [0, 0, 1, 1], [], []>} : vector<16x36xf32>, vector<36x384xf32>, vector<16x384xf32> -> vector<16x384xf32>
    %cst_40 = arith.constant 0.000000e+00 : f32
    %67 = vector.broadcast %cst_40 : f32 to vector<16x128xf32>
    %68 = vector.extract_strided_slice %66 {offsets = [0, 0], sizes = [16, 128], strides = [1, 1]} : vector<16x384xf32> to vector<16x128xf32>
    %cst_41 = arith.constant dense<0.000000e+00> : vector<16x128xf32>
    %69 = tpu.matmul %4, %68, %cst_41 {dimension_numbers = #tpu.dot_dimension_numbers<[1], [0], [0], [1], [0, 0, 1, 1], [], []>} : vector<16x16xf32>, vector<16x128xf32>, vector<16x128xf32> -> vector<16x128xf32>
    %70 = arith.addf %67, %69 : vector<16x128xf32>
    %71 = vector.extract_strided_slice %66 {offsets = [0, 128], sizes = [16, 128], strides = [1, 1]} : vector<16x384xf32> to vector<16x128xf32>
    %cst_42 = arith.constant dense<0.000000e+00> : vector<16x128xf32>
    %72 = tpu.matmul %6, %71, %cst_42 {dimension_numbers = #tpu.dot_dimension_numbers<[1], [0], [0], [1], [0, 0, 1, 1], [], []>} : vector<16x16xf32>, vector<16x128xf32>, vector<16x128xf32> -> vector<16x128xf32>
    %73 = arith.addf %70, %72 : vector<16x128xf32>
    %74 = vector.extract_strided_slice %66 {offsets = [0, 256], sizes = [16, 128], strides = [1, 1]} : vector<16x384xf32> to vector<16x128xf32>
    %cst_43 = arith.constant dense<0.000000e+00> : vector<16x128xf32>
    %75 = tpu.matmul %8, %74, %cst_43 {dimension_numbers = #tpu.dot_dimension_numbers<[1], [0], [0], [1], [0, 0, 1, 1], [], []>} : vector<16x16xf32>, vector<16x128xf32>, vector<16x128xf32> -> vector<16x128xf32>
    %76 = arith.addf %73, %75 : vector<16x128xf32>
    %77 = vector.broadcast %2 : vector<1x128xf32> to vector<16x128xf32>
    %78 = arith.addf %76, %77 : vector<16x128xf32>
    %79 = vector.extract_strided_slice %78 {offsets = [0, 0], sizes = [16, 32], strides = [1, 1]} : vector<16x128xf32> to vector<16x32xf32>
    %80 = arith.negf %79 : vector<16x32xf32>
    %81 = math.exp %80 : vector<16x32xf32>
    %cst_44 = arith.constant 1.000000e+00 : f32
    %82 = vector.broadcast %cst_44 : f32 to vector<16x32xf32>
    %83 = arith.addf %82, %81 : vector<16x32xf32>
    %84 = arith.divf %82, %83 : vector<16x32xf32>
    %85 = vector.extract_strided_slice %78 {offsets = [0, 32], sizes = [16, 32], strides = [1, 1]} : vector<16x128xf32> to vector<16x32xf32>
    %86 = arith.negf %85 : vector<16x32xf32>
    %87 = math.exp %86 : vector<16x32xf32>
    %cst_45 = arith.constant 1.000000e+00 : f32
    %88 = vector.broadcast %cst_45 : f32 to vector<16x32xf32>
    %89 = arith.addf %88, %87 : vector<16x32xf32>
    %90 = arith.divf %88, %89 : vector<16x32xf32>
    %91 = vector.extract_strided_slice %78 {offsets = [0, 64], sizes = [16, 32], strides = [1, 1]} : vector<16x128xf32> to vector<16x32xf32>
    %92 = arith.mulf %90, %65 : vector<16x32xf32>
    %cst_46 = arith.constant dense<0.000000e+00> : vector<16x384xf32>
    %93 = tpu.matmul %92, %1, %cst_46 {dimension_numbers = #tpu.dot_dimension_numbers<[1], [0], [0], [1], [0, 0, 1, 1], [], []>} : vector<16x32xf32>, vector<32x384xf32>, vector<16x384xf32> -> vector<16x384xf32>
    %cst_47 = arith.constant 0.000000e+00 : f32
    %94 = vector.broadcast %cst_47 : f32 to vector<16x128xf32>
    %95 = vector.extract_strided_slice %93 {offsets = [0, 0], sizes = [16, 128], strides = [1, 1]} : vector<16x384xf32> to vector<16x128xf32>
    %cst_48 = arith.constant dense<0.000000e+00> : vector<16x128xf32>
    %96 = tpu.matmul %4, %95, %cst_48 {dimension_numbers = #tpu.dot_dimension_numbers<[1], [0], [0], [1], [0, 0, 1, 1], [], []>} : vector<16x16xf32>, vector<16x128xf32>, vector<16x128xf32> -> vector<16x128xf32>
    %97 = arith.addf %94, %96 : vector<16x128xf32>
    %98 = vector.extract_strided_slice %93 {offsets = [0, 128], sizes = [16, 128], strides = [1, 1]} : vector<16x384xf32> to vector<16x128xf32>
    %cst_49 = arith.constant dense<0.000000e+00> : vector<16x128xf32>
    %99 = tpu.matmul %6, %98, %cst_49 {dimension_numbers = #tpu.dot_dimension_numbers<[1], [0], [0], [1], [0, 0, 1, 1], [], []>} : vector<16x16xf32>, vector<16x128xf32>, vector<16x128xf32> -> vector<16x128xf32>
    %100 = arith.addf %97, %99 : vector<16x128xf32>
    %101 = vector.extract_strided_slice %93 {offsets = [0, 256], sizes = [16, 128], strides = [1, 1]} : vector<16x384xf32> to vector<16x128xf32>
    %cst_50 = arith.constant dense<0.000000e+00> : vector<16x128xf32>
    %102 = tpu.matmul %8, %101, %cst_50 {dimension_numbers = #tpu.dot_dimension_numbers<[1], [0], [0], [1], [0, 0, 1, 1], [], []>} : vector<16x16xf32>, vector<16x128xf32>, vector<16x128xf32> -> vector<16x128xf32>
    %103 = arith.addf %100, %102 : vector<16x128xf32>
    %104 = vector.extract_strided_slice %103 {offsets = [0, 0], sizes = [16, 32], strides = [1, 1]} : vector<16x128xf32> to vector<16x32xf32>
    %105 = arith.addf %91, %104 : vector<16x32xf32>
    %106 = math.tanh %105 : vector<16x32xf32>
    %107 = arith.mulf %84, %106 : vector<16x32xf32>
    %cst_51 = arith.constant 1.000000e+00 : f32
    %108 = vector.broadcast %cst_51 : f32 to vector<16x32xf32>
    %109 = arith.subf %108, %84 : vector<16x32xf32>
    %110 = arith.mulf %109, %65 : vector<16x32xf32>
    %111 = arith.addf %107, %110 : vector<16x32xf32>
    %c1_52 = arith.constant 1 : index
    %c0_53 = arith.constant 0 : index
    %c0_54 = arith.constant 0 : index
    %112 = vector.load %arg7[%c1_52, %c0_53, %c0_54] : memref<2x16x32xf32, #tpu.memory_space<vmem>>, vector<1x16x32xf32>
    %113 = vector.shape_cast %112 : vector<1x16x32xf32> to vector<16x32xf32>
    %114 = vector.shape_cast %111 : vector<16x32xf32> to vector<1x16x32xf32>
    tpu.vector_store %arg7[%c1_52, %c0_53, %c0_54], %114 {strides = array<i32>} : memref<2x16x32xf32, #tpu.memory_space<vmem>>, vector<1x16x32xf32>,
    return
  }
  func.func @transform_0(%arg0: i32) -> (i32, i32, i32) {
    %c0_i32 = arith.constant 0 : i32
    %c0_i32_0 = arith.constant 0 : i32
    %c0_i32_1 = arith.constant 0 : i32
    %c0_i32_2 = arith.constant 0 : i32
    return %c0_i32, %c0_i32_0, %c0_i32_1 : i32, i32, i32
  }
  func.func @transform_1(%arg0: i32) -> (i32, i32, i32) {
    %c0_i32 = arith.constant 0 : i32
    %c0_i32_0 = arith.constant 0 : i32
    %c0_i32_1 = arith.constant 0 : i32
    return %arg0, %c0_i32, %c0_i32_0 : i32, i32, i32
  }
  func.func @transform_2(%arg0: i32) -> (i32, i32, i32) {
    %c0_i32 = arith.constant 0 : i32
    %c0_i32_0 = arith.constant 0 : i32
    %c0_i32_1 = arith.constant 0 : i32
    return %arg0, %c0_i32, %c0_i32_0 : i32, i32, i32
  }
  func.func @transform_3(%arg0: i32) -> (i32, i32) {
    %c0_i32 = arith.constant 0 : i32
    %c0_i32_0 = arith.constant 0 : i32
    %c0_i32_1 = arith.constant 0 : i32
    return %c0_i32, %c0_i32_0 : i32, i32
  }
  func.func @transform_4(%arg0: i32) -> (i32, i32) {
    %c0_i32 = arith.constant 0 : i32
    %c0_i32_0 = arith.constant 0 : i32
    %c0_i32_1 = arith.constant 0 : i32
    return %c0_i32, %c0_i32_0 : i32, i32
  }
  func.func @transform_5(%arg0: i32) -> (i32, i32) {
    %c0_i32 = arith.constant 0 : i32
    %c0_i32_0 = arith.constant 0 : i32
    %c0_i32_1 = arith.constant 0 : i32
    return %c0_i32, %c0_i32_0 : i32, i32
  }
  func.func @transform_6(%arg0: i32) -> (i32, i32, i32) {
    %c0_i32 = arith.constant 0 : i32
    %c0_i32_0 = arith.constant 0 : i32
    %c0_i32_1 = arith.constant 0 : i32
    return %arg0, %c0_i32, %c0_i32_0 : i32, i32, i32
  }
}

</mosaic_0001>

<llo_original>
// kernel: tpu_custom_call.1
$region0: #{tpu_custom_call.1}
  #allocation0 [shape = 'u32[]', space=smem, size = 0x4, offset = 0x4, fixed_abs, tag = 'smem constant byte address 0x4 - core index']
  #allocation1 [shape = 'u32[144,128]{1,0:T(1,128)}', space=vmem, size = 0x12000, scoped, tag = 'internal scratch']
  %s0 = inlined_call_operand.hbm [shape: f32[3,16,16], index: 0, kind: input, shape index: {}]
  %s1 = inlined_call_operand.hbm [shape: f32[2,16,36], index: 1, kind: input, shape index: {}]
  %s2 = inlined_call_operand.hbm [shape: f32[2,16,32], index: 2, kind: input, shape index: {}]
  %s3 = inlined_call_operand.hbm [shape: f32[36,384], index: 3, kind: input, shape index: {}]
  %s4 = inlined_call_operand.hbm [shape: f32[32,384], index: 4, kind: input, shape index: {}]
  %s5 = inlined_call_operand.vmem [shape: f32[1,128], index: 5, kind: input, shape index: {}]
  %s6 = inlined_call_operand.hbm [shape: f32[2,16,32], index: 6, kind: output, shape index: {}]
  %s7 = sld [smem:[#allocation0]]
  $region54: #{tpu_custom_call.1} parent=0
    _
  %s9 = ssub.s32 1, %s7
  %s10 = scalar_select 0, %s9, %s7
  $region1: #{tpu_custom_call.1} parent=0
    #allocation2 [shape = 'u8[24576]{0}', space=vmem, size = 0x6000, scoped, tag = 'input window, operand 0, single buffered']
    #allocation3 [shape = 's32[1]{0}', space=sflag, size = 0x4, scoped, tag = 'scoped memory for tpu_custom_call.1']
    #allocation4 [shape = 's32[1]{0}', space=sflag, size = 0x4, scoped, tag = 'scoped memory for tpu_custom_call.1']
    #allocation5 [shape = 'u8[16384]{0}', space=vmem, size = 0x4000, scoped, tag = 'input window, operand 1, single buffered']
    #allocation6 [shape = 's32[1]{0}', space=sflag, size = 0x4, scoped, tag = 'scoped memory for tpu_custom_call.1']
    #allocation7 [shape = 'u8[16384]{0}', space=vmem, size = 0x4000, scoped, tag = 'input window, operand 2, single buffered']
    #allocation8 [shape = 'u8[61440]{0}', space=vmem, size = 0xf000, scoped, tag = 'input window, operand 3, single buffered']
    #allocation9 [shape = 's32[1]{0}', space=sflag, size = 0x4, scoped, tag = 'scoped memory for tpu_custom_call.1']
    #allocation10 [shape = 'u8[49152]{0}', space=vmem, size = 0xc000, scoped, tag = 'input window, operand 4, single buffered']
    #allocation11 [shape = 'u8[16384]{0}', space=vmem, size = 0x4000, scoped, tag = 'output window, operand 0, single buffered']
    %11 = vsyncpa [#allocation3], 0
    %12 = vsyncpa [#allocation6], 0
    %13 = vsyncpa [#allocation9], 0
    %14 = vsyncpa [#allocation4], 0
    // Predicated region
    $region2: #{tpu_custom_call.1} parent=1 // pred_check
      _
    $region3: #{tpu_custom_call.1} parent=1 // pred_check_branch
      %16 = sbr.rel (0) target = $region5
    $region4: #{tpu_custom_call.1} parent=1 // pred_region
      %s18 = ssub.s32 768, 768
      %19 = vsyncadd [#allocation3], %s18
      %s20 = sshll.u32 [#allocation2], 4
      %s21 = int_to_ptr.vmem [resolvable:$true] %s20
      %26 = dma.hbm_to_vmem [thread:$0]  %s0, 768, %s21, [#allocation3], 128, 128, 8
    $region5: #{tpu_custom_call.1} parent=1 // pred_fallthru
      _
    // Predicated region
    $region6: #{tpu_custom_call.1} parent=1 // pred_check
      _
    $region7: #{tpu_custom_call.1} parent=1 // pred_check_branch
      %28 = sbr.rel (0) target = $region9
    $region8: #{tpu_custom_call.1} parent=1 // pred_region
      %s30 = ssub.s32 512, 512
      %31 = vsyncadd [#allocation6], %s30
      %s32 = sshll.u32 [#allocation5], 4
      %s33 = int_to_ptr.vmem [resolvable:$true] %s32
      %38 = dma.hbm_to_vmem [thread:$0]  %s1, 512, %s33, [#allocation6], 128, 128, 8
    $region9: #{tpu_custom_call.1} parent=1 // pred_fallthru
      _
    // Predicated region
    $region10: #{tpu_custom_call.1} parent=1 // pred_check
      _
    $region11: #{tpu_custom_call.1} parent=1 // pred_check_branch
      %40 = sbr.rel (0) target = $region13
    $region12: #{tpu_custom_call.1} parent=1 // pred_region
      %s42 = ssub.s32 512, 512
      %43 = vsyncadd [#allocation6], %s42
      %s44 = sshll.u32 [#allocation7], 4
      %s45 = int_to_ptr.vmem [resolvable:$true] %s44
      %50 = dma.hbm_to_vmem [thread:$0]  %s2, 512, %s45, [#allocation6], 128, 128, 8
    $region13: #{tpu_custom_call.1} parent=1 // pred_fallthru
      _
    // Predicated region
    $region14: #{tpu_custom_call.1} parent=1 // pred_check
      _
    $region15: #{tpu_custom_call.1} parent=1 // pred_check_branch
      %52 = sbr.rel (0) target = $region17
    $region16: #{tpu_custom_call.1} parent=1 // pred_region
      %s54 = ssub.s32 1920, 1920
      %55 = vsyncadd [#allocation9], %s54
      %s56 = sshll.u32 [#allocation8], 4
      %s57 = int_to_ptr.vmem [resolvable:$true] %s56
      %62 = dma.hbm_to_vmem [thread:$0]  %s3, 1920, %s57, [#allocation9], 384, 384, 24
    $region17: #{tpu_custom_call.1} parent=1 // pred_fallthru
      _
    // Predicated region
    $region18: #{tpu_custom_call.1} parent=1 // pred_check
      _
    $region19: #{tpu_custom_call.1} parent=1 // pred_check_branch
      %64 = sbr.rel (0) target = $region21
    $region20: #{tpu_custom_call.1} parent=1 // pred_region
      %s66 = ssub.s32 1536, 1536
      %67 = vsyncadd [#allocation9], %s66
      %s68 = sshll.u32 [#allocation10], 4
      %s69 = int_to_ptr.vmem [resolvable:$true] %s68
      %74 = dma.hbm_to_vmem [thread:$0]  %s4, 1536, %s69, [#allocation9], 384, 384, 24
    $region21: #{tpu_custom_call.1} parent=1 // pred_fallthru
      _
    // Predicated region
    $region22: #{tpu_custom_call.1} parent=1 // pred_check
      _
    $region23: #{tpu_custom_call.1} parent=1 // pred_check_branch
      %76 = sbr.rel (0) target = $region25
    $region24: #{tpu_custom_call.1} parent=1 // pred_region
      _
    $region25: #{tpu_custom_call.1} parent=1 // pred_fallthru
      _
    // Predicated region
    $region26: #{tpu_custom_call.1} parent=1 // pred_check
      _
    $region27: #{tpu_custom_call.1} parent=1 // pred_check_branch
      %78 = sbr.rel (0) target = $region29
    $region28: #{tpu_custom_call.1} parent=1 // pred_region
      %79 = dma.done [#allocation3], 768
    $region29: #{tpu_custom_call.1} parent=1 // pred_fallthru
      _
    // Predicated region
    $region30: #{tpu_custom_call.1} parent=1 // pred_check
      _
    $region31: #{tpu_custom_call.1} parent=1 // pred_check_branch
      %81 = sbr.rel (0) target = $region33
    $region32: #{tpu_custom_call.1} parent=1 // pred_region
      %82 = dma.done [#allocation6], 512
    $region33: #{tpu_custom_call.1} parent=1 // pred_fallthru
      _
    // Predicated region
    $region34: #{tpu_custom_call.1} parent=1 // pred_check
      _
    $region35: #{tpu_custom_call.1} parent=1 // pred_check_branch
      %84 = sbr.rel (0) target = $region37
    $region36: #{tpu_custom_call.1} parent=1 // pred_region
      %85 = dma.done [#allocation6], 512
    $region37: #{tpu_custom_call.1} parent=1 // pred_fallthru
      _
    // Predicated region
    $region38: #{tpu_custom_call.1} parent=1 // pred_check
      _
    $region39: #{tpu_custom_call.1} parent=1 // pred_check_branch
      %87 = sbr.rel (0) target = $region41
    $region40: #{tpu_custom_call.1} parent=1 // pred_region
      %88 = dma.done [#allocation9], 1920
    $region41: #{tpu_custom_call.1} parent=1 // pred_fallthru
      _
    // Predicated region
    $region42: #{tpu_custom_call.1} parent=1 // pred_check
      _
    $region43: #{tpu_custom_call.1} parent=1 // pred_check_branch
      %90 = sbr.rel (0) target = $region45
    $region44: #{tpu_custom_call.1} parent=1 // pred_region
      %91 = dma.done [#allocation9], 1536
    $region45: #{tpu_custom_call.1} parent=1 // pred_fallthru
      _
    %v92 = vld [vmem:[#allocation8] sm:$0xff]
    %v93 = vld [vmem:[#allocation8 + $0x8] sm:$0xff]
    %v94 = vld [vmem:[#allocation8 + $0x10] sm:$0xff]
    %v95 = vld [vmem:[#allocation8 + $0x18] sm:$0xff]
    %v96 = vld [vmem:[#allocation8 + $0x20] sm:$0xff]
    %v97 = vld [vmem:[#allocation8 + $0x28] sm:$0xff]
    %v98 = vld [vmem:[#allocation8 + $0x30] sm:$0xff]
    %v99 = vld [vmem:[#allocation8 + $0x38] sm:$0xff]
    %v100 = vld [vmem:[#allocation8 + $0x40] sm:$0xff]
    %v101 = vld [vmem:[#allocation8 + $0x48] sm:$0xff]
    %v102 = vld [vmem:[#allocation8 + $0x50] sm:$0xff]
    %v103 = vld [vmem:[#allocation8 + $0x58] sm:$0xff]
    %v104 = vld [vmem:[#allocation8 + $0x60] sm:$0xf]
    %v105 = vld [vmem:[#allocation8 + $0x68] sm:$0xf]
    %v106 = vld [vmem:[#allocation8 + $0x70] sm:$0xf]
    %v107 = vld [vmem:[#allocation10] sm:$0xff]
    %v108 = vld [vmem:[#allocation10 + $0x8] sm:$0xff]
    %v109 = vld [vmem:[#allocation10 + $0x10] sm:$0xff]
    %v110 = vld [vmem:[#allocation10 + $0x18] sm:$0xff]
    %v111 = vld [vmem:[#allocation10 + $0x20] sm:$0xff]
    %v112 = vld [vmem:[#allocation10 + $0x28] sm:$0xff]
    %v113 = vld [vmem:[#allocation10 + $0x30] sm:$0xff]
    %v114 = vld [vmem:[#allocation10 + $0x38] sm:$0xff]
    %v115 = vld [vmem:[#allocation10 + $0x40] sm:$0xff]
    %v116 = vld [vmem:[#allocation10 + $0x48] sm:$0xff]
    %v117 = vld [vmem:[#allocation10 + $0x50] sm:$0xff]
    %v118 = vld [vmem:[#allocation10 + $0x58] sm:$0xff]
    %v119 = vld [vmem:[%s5] sm:$0x1]
    %v120 = vld [vmem:[#allocation2] sm:$0xff]
    %v121 = vld [vmem:[#allocation2 + $0x8] sm:$0xff]
    %s122 = scalar_lea.vmem [#allocation2], 16
    %v123 = vld [vmem:[%s122] sm:$0xff]
    %v124 = vld [vmem:[%s122 + $0x8] sm:$0xff]
    %s125 = scalar_lea.vmem [#allocation2], 32
    %v126 = vld [vmem:[%s125] sm:$0xff]
    %v127 = vld [vmem:[%s125 + $0x8] sm:$0xff]
    %v128 = vld [vmem:[#allocation5] sm:$0xff]
    %v129 = vld [vmem:[#allocation5 + $0x8] sm:$0xff]
    %v130 = vld [vmem:[#allocation7] sm:$0xff]
    %v131 = vld [vmem:[#allocation7 + $0x8] sm:$0xff]
    %vm132 = vcmask 293888
    %v134 = vsel %vm132, %v128, 0
    %v137 = vsel %vm132, %v129, 0
    %vm139 = vcmask 1043456
    %v141 = vsel %vm139, %v104, 0
    %v144 = vsel %vm139, %v105, 0
    %v147 = vsel %vm139, %v106, 0
    %149 = vmatprep.subr.mxu0 %v93
    %150 = vmatpush1.msra.mxu0 %v92
    %151 = vmatprep.subr.mxu0 %v96
    %152 = vmatpush1.msra.mxu0 %v95
    %153 = vmatprep.subr.mxu0 %v99
    %154 = vmatpush1.msra.mxu0 %v98
    %155 = vmatprep.subr.mxu0 %v102
    %156 = vmatpush1.msra.mxu0 %v101
    %157 = vmatprep.subr.mxu0 %v144
    %158 = vmatpush1.msra.mxu0 %v141
    %159 = vmatprep.subr.mxu0 0.0
    %160 = vmatpush1.msra.mxu0 0.0
    %161 = vmatprep.subr.mxu0 0.0
    %162 = vmatpush1.msra.mxu0 0.0
    %163 = vmatprep.subr.mxu0 0.0
    %164 = vmatpush1.msra.mxu0 0.0
    %165 = vmatprep.subr.mxu0 0.0
    %166 = vmatpush1.msra.mxu0 0.0
    %167 = vmatprep.subr.mxu0 0.0
    %168 = vmatpush1.msra.mxu0 0.0
    %169 = vmatprep.subr.mxu0 0.0
    %170 = vmatpush1.msra.mxu0 0.0
    %171 = vmatprep.subr.mxu0 0.0
    %172 = vmatpush1.msra.mxu0 0.0
    %173 = vmatprep.subr.mxu0 0.0
    %174 = vmatpush1.msra.mxu0 0.0
    %175 = vmatprep.subr.mxu0 0.0
    %176 = vmatpush1.msra.mxu0 0.0
    %177 = vmatprep.subr.mxu0 0.0
    %178 = vmatpush1.msra.mxu0 0.0
    %179 = vmatprep.subr.mxu0 0.0
    %180 = vmatpush1.msra.mxu0 0.0
    %181 = vmatprep.subr.mxu0 0.0
    %182 = vmatpush1.msra.mxu0 0.0
    %183 = vmatprep.subr.mxu0 0.0
    %184 = vmatpush1.msra.mxu0 0.0
    %185 = vmatprep.subr.mxu0 0.0
    %186 = vmatpush1.msra.mxu0 0.0
    %187 = vmatprep.subr.mxu0 0.0
    %188 = vmatpush1.msra.mxu0 0.0
    %189 = vmatprep.subr.mxu0 0.0
    %190 = vmatpush1.msra.mxu0 0.0
    %191 = vmatprep.subr.mxu0 0.0
    %192 = vmatpush1.msra.mxu0 0.0
    %193 = vmatprep.subr.mxu0 0.0
    %194 = vmatpush1.msra.mxu0 0.0
    %195 = vmatprep.subr.mxu0 0.0
    %196 = vmatpush1.msra.mxu0 0.0
    %197 = vmatprep.subr.mxu0 0.0
    %198 = vmatpush1.msra.mxu0 0.0
    %199 = vmatprep.subr.mxu0 0.0
    %200 = vmatpush1.msra.mxu0 0.0
    %201 = vmatprep.subr.mxu0 0.0
    %202 = vmatpush1.msra.mxu0 0.0
    %203 = vmatprep.subr.mxu0 0.0
    %204 = vmatpush1.msra.mxu0 0.0
    %205 = vmatprep.subr.mxu0 0.0
    %206 = vmatpush1.msra.mxu0 0.0
    %207 = vmatprep.subr.mxu0 0.0
    %208 = vmatpush1.msra.mxu0 0.0
    %209 = vmatprep.subr.mxu0 0.0
    %210 = vmatpush1.msra.mxu0 0.0
    %211 = vmatprep.subr.mxu0 0.0
    %212 = vmatpush1.msra.mxu0 0.0
    %213 = vmatprep.mubr.f32.mxu0 0.0
    %214 = vmatmul.mubr.f32.gmra.mrb[0].mxu0 %v134
    %v215 = vpop.f32.mrb[0].mxu0
    %v216 = vadd.f32 0.0, %v215
    %v217 = vpop.f32.mrb[0].mxu0
    %v218 = vadd.f32 0.0, %v217
    %219 = vmatprep.mubr.f32.mxu0 0.0
    %220 = vmatmul.mubr.f32.gmra.mrb[0].mxu0 %v137
    %v221 = vpop.f32.mrb[0].mxu0
    %v222 = vadd.f32 0.0, %v221
    %v223 = vpop.f32.mrb[0].mxu0
    %v224 = vadd.f32 0.0, %v223
    %225 = vdwg.mxu0
    %226 = vmatprep.subr.mxu0 0.0
    %227 = vmatpush1.msra.mxu0 %v94
    %228 = vmatprep.subr.mxu0 0.0
    %229 = vmatpush1.msra.mxu0 %v97
    %230 = vmatprep.subr.mxu0 0.0
    %231 = vmatpush1.msra.mxu0 %v100
    %232 = vmatprep.subr.mxu0 0.0
    %233 = vmatpush1.msra.mxu0 %v103
    %234 = vmatprep.subr.mxu0 0.0
    %235 = vmatpush1.msra.mxu0 %v147
    %236 = vmatprep.subr.mxu0 0.0
    %237 = vmatpush1.msra.mxu0 0.0
    %238 = vmatprep.subr.mxu0 0.0
    %239 = vmatpush1.msra.mxu0 0.0
    %240 = vmatprep.subr.mxu0 0.0
    %241 = vmatpush1.msra.mxu0 0.0
    %242 = vmatprep.subr.mxu0 0.0
    %243 = vmatpush1.msra.mxu0 0.0
    %244 = vmatprep.subr.mxu0 0.0
    %245 = vmatpush1.msra.mxu0 0.0
    %246 = vmatprep.subr.mxu0 0.0
    %247 = vmatpush1.msra.mxu0 0.0
    %248 = vmatprep.subr.mxu0 0.0
    %249 = vmatpush1.msra.mxu0 0.0
    %250 = vmatprep.subr.mxu0 0.0
    %251 = vmatpush1.msra.mxu0 0.0
    %252 = vmatprep.subr.mxu0 0.0
    %253 = vmatpush1.msra.mxu0 0.0
    %254 = vmatprep.subr.mxu0 0.0
    %255 = vmatpush1.msra.mxu0 0.0
    %256 = vmatprep.subr.mxu0 0.0
    %257 = vmatpush1.msra.mxu0 0.0
    %258 = vmatprep.subr.mxu0 0.0
    %259 = vmatpush1.msra.mxu0 0.0
    %260 = vmatprep.subr.mxu0 0.0
    %261 = vmatpush1.msra.mxu0 0.0
    %262 = vmatprep.subr.mxu0 0.0
    %263 = vmatpush1.msra.mxu0 0.0
    %264 = vmatprep.subr.mxu0 0.0
    %265 = vmatpush1.msra.mxu0 0.0
    %266 = vmatprep.subr.mxu0 0.0
    %267 = vmatpush1.msra.mxu0 0.0
    %268 = vmatprep.subr.mxu0 0.0
    %269 = vmatpush1.msra.mxu0 0.0
    %270 = vmatprep.subr.mxu0 0.0
    %271 = vmatpush1.msra.mxu0 0.0
    %272 = vmatprep.subr.mxu0 0.0
    %273 = vmatpush1.msra.mxu0 0.0
    %274 = vmatprep.subr.mxu0 0.0
    %275 = vmatpush1.msra.mxu0 0.0
    %276 = vmatprep.subr.mxu0 0.0
    %277 = vmatpush1.msra.mxu0 0.0
    %278 = vmatprep.subr.mxu0 0.0
    %279 = vmatpush1.msra.mxu0 0.0
    %280 = vmatprep.subr.mxu0 0.0
    %281 = vmatpush1.msra.mxu0 0.0
    %282 = vmatprep.subr.mxu0 0.0
    %283 = vmatpush1.msra.mxu0 0.0
    %284 = vmatprep.subr.mxu0 0.0
    %285 = vmatpush1.msra.mxu0 0.0
    %286 = vmatprep.subr.mxu0 0.0
    %287 = vmatpush1.msra.mxu0 0.0
    %288 = vmatprep.subr.mxu0 0.0
    %289 = vmatpush1.msra.mxu0 0.0
    %290 = vmatprep.mubr.f32.mxu0 0.0
    %291 = vmatmul.mubr.f32.gmra.mrb[0].mxu0 %v134
    %v292 = vpop.f32.mrb[0].mxu0
    %v293 = vadd.f32 0.0, %v292
    %v294 = vpop.f32.mrb[0].mxu0
    %295 = vmatprep.mubr.f32.mxu0 0.0
    %296 = vmatmul.mubr.f32.gmra.mrb[0].mxu0 %v137
    %v297 = vpop.f32.mrb[0].mxu0
    %v298 = vadd.f32 0.0, %v297
    %v299 = vpop.f32.mrb[0].mxu0
    %300 = vdwg.mxu0
    %vm301 = vcmask 130048
    %v303 = vsel %vm301, %v123, 0
    %v306 = vsel %vm301, %v124, 0
    %308 = vmatprep.subr.mxu0 0.0
    %309 = vmatpush1.msra.mxu0 %v218
    %310 = vmatprep.subr.mxu0 0.0
    %311 = vmatpush1.msra.mxu0 %v224
    %312 = vmatprep.subr.mxu0 0.0
    %313 = vmatpush1.msra.mxu0 0.0
    %314 = vmatprep.subr.mxu0 0.0
    %315 = vmatpush1.msra.mxu0 0.0
    %316 = vmatprep.subr.mxu0 0.0
    %317 = vmatpush1.msra.mxu0 0.0
    %318 = vmatprep.subr.mxu0 0.0
    %319 = vmatpush1.msra.mxu0 0.0
    %320 = vmatprep.subr.mxu0 0.0
    %321 = vmatpush1.msra.mxu0 0.0
    %322 = vmatprep.subr.mxu0 0.0
    %323 = vmatpush1.msra.mxu0 0.0
    %324 = vmatprep.subr.mxu0 0.0
    %325 = vmatpush1.msra.mxu0 0.0
    %326 = vmatprep.subr.mxu0 0.0
    %327 = vmatpush1.msra.mxu0 0.0
    %328 = vmatprep.subr.mxu0 0.0
    %329 = vmatpush1.msra.mxu0 0.0
    %330 = vmatprep.subr.mxu0 0.0
    %331 = vmatpush1.msra.mxu0 0.0
    %332 = vmatprep.subr.mxu0 0.0
    %333 = vmatpush1.msra.mxu0 0.0
    %334 = vmatprep.subr.mxu0 0.0
    %335 = vmatpush1.msra.mxu0 0.0
    %336 = vmatprep.subr.mxu0 0.0
    %337 = vmatpush1.msra.mxu0 0.0
    %338 = vmatprep.subr.mxu0 0.0
    %339 = vmatpush1.msra.mxu0 0.0
    %340 = vmatprep.subr.mxu0 0.0
    %341 = vmatpush1.msra.mxu0 0.0
    %342 = vmatprep.subr.mxu0 0.0
    %343 = vmatpush1.msra.mxu0 0.0
    %344 = vmatprep.subr.mxu0 0.0
    %345 = vmatpush1.msra.mxu0 0.0
    %346 = vmatprep.subr.mxu0 0.0
    %347 = vmatpush1.msra.mxu0 0.0
    %348 = vmatprep.subr.mxu0 0.0
    %349 = vmatpush1.msra.mxu0 0.0
    %350 = vmatprep.subr.mxu0 0.0
    %351 = vmatpush1.msra.mxu0 0.0
    %352 = vmatprep.subr.mxu0 0.0
    %353 = vmatpush1.msra.mxu0 0.0
    %354 = vmatprep.subr.mxu0 0.0
    %355 = vmatpush1.msra.mxu0 0.0
    %356 = vmatprep.subr.mxu0 0.0
    %357 = vmatpush1.msra.mxu0 0.0
    %358 = vmatprep.subr.mxu0 0.0
    %359 = vmatpush1.msra.mxu0 0.0
    %360 = vmatprep.subr.mxu0 0.0
    %361 = vmatpush1.msra.mxu0 0.0
    %362 = vmatprep.subr.mxu0 0.0
    %363 = vmatpush1.msra.mxu0 0.0
    %364 = vmatprep.subr.mxu0 0.0
    %365 = vmatpush1.msra.mxu0 0.0
    %366 = vmatprep.subr.mxu0 0.0
    %367 = vmatpush1.msra.mxu0 0.0
    %368 = vmatprep.subr.mxu0 0.0
    %369 = vmatpush1.msra.mxu0 0.0
    %370 = vmatprep.subr.mxu0 0.0
    %371 = vmatpush1.msra.mxu0 0.0
    %372 = vmatprep.mubr.f32.mxu0 0.0
    %373 = vmatmul.mubr.f32.gmra.mrb[0].mxu0 %v303
    %v374 = vpop.f32.mrb[0].mxu0
    %v375 = vadd.f32 0.0, %v374
    %v376 = vpop.f32.mrb[0].mxu0
    %377 = vmatprep.mubr.f32.mxu0 0.0
    %378 = vmatmul.mubr.f32.gmra.mrb[0].mxu0 %v306
    %v379 = vpop.f32.mrb[0].mxu0
    %v380 = vadd.f32 0.0, %v379
    %v381 = vpop.f32.mrb[0].mxu0
    %382 = vdwg.mxu0
    %v384 = vsel %vm301, %v120, 0
    %v387 = vsel %vm301, %v121, 0
    %389 = vmatprep.subr.mxu0 0.0
    %390 = vmatpush1.msra.mxu0 %v216
    %391 = vmatprep.subr.mxu0 0.0
    %392 = vmatpush1.msra.mxu0 %v222
    %393 = vmatprep.subr.mxu0 0.0
    %394 = vmatpush1.msra.mxu0 0.0
    %395 = vmatprep.subr.mxu0 0.0
    %396 = vmatpush1.msra.mxu0 0.0
    %397 = vmatprep.subr.mxu0 0.0
    %398 = vmatpush1.msra.mxu0 0.0
    %399 = vmatprep.subr.mxu0 0.0
    %400 = vmatpush1.msra.mxu0 0.0
    %401 = vmatprep.subr.mxu0 0.0
    %402 = vmatpush1.msra.mxu0 0.0
    %403 = vmatprep.subr.mxu0 0.0
    %404 = vmatpush1.msra.mxu0 0.0
    %405 = vmatprep.subr.mxu0 0.0
    %406 = vmatpush1.msra.mxu0 0.0
    %407 = vmatprep.subr.mxu0 0.0
    %408 = vmatpush1.msra.mxu0 0.0
    %409 = vmatprep.subr.mxu0 0.0
    %410 = vmatpush1.msra.mxu0 0.0
    %411 = vmatprep.subr.mxu0 0.0
    %412 = vmatpush1.msra.mxu0 0.0
    %413 = vmatprep.subr.mxu0 0.0
    %414 = vmatpush1.msra.mxu0 0.0
    %415 = vmatprep.subr.mxu0 0.0
    %416 = vmatpush1.msra.mxu0 0.0
    %417 = vmatprep.subr.mxu0 0.0
    %418 = vmatpush1.msra.mxu0 0.0
    %419 = vmatprep.subr.mxu0 0.0
    %420 = vmatpush1.msra.mxu0 0.0
    %421 = vmatprep.subr.mxu0 0.0
    %422 = vmatpush1.msra.mxu0 0.0
    %423 = vmatprep.subr.mxu0 0.0
    %424 = vmatpush1.msra.mxu0 0.0
    %425 = vmatprep.subr.mxu0 0.0
    %426 = vmatpush1.msra.mxu0 0.0
    %427 = vmatprep.subr.mxu0 0.0
    %428 = vmatpush1.msra.mxu0 0.0
    %429 = vmatprep.subr.mxu0 0.0
    %430 = vmatpush1.msra.mxu0 0.0
    %431 = vmatprep.subr.mxu0 0.0
    %432 = vmatpush1.msra.mxu0 0.0
    %433 = vmatprep.subr.mxu0 0.0
    %434 = vmatpush1.msra.mxu0 0.0
    %435 = vmatprep.subr.mxu0 0.0
    %436 = vmatpush1.msra.mxu0 0.0
    %437 = vmatprep.subr.mxu0 0.0
    %438 = vmatpush1.msra.mxu0 0.0
    %439 = vmatprep.subr.mxu0 0.0
    %440 = vmatpush1.msra.mxu0 0.0
    %441 = vmatprep.subr.mxu0 0.0
    %442 = vmatpush1.msra.mxu0 0.0
    %443 = vmatprep.subr.mxu0 0.0
    %444 = vmatpush1.msra.mxu0 0.0
    %445 = vmatprep.subr.mxu0 0.0
    %446 = vmatpush1.msra.mxu0 0.0
    %447 = vmatprep.subr.mxu0 0.0
    %448 = vmatpush1.msra.mxu0 0.0
    %449 = vmatprep.subr.mxu0 0.0
    %450 = vmatpush1.msra.mxu0 0.0
    %451 = vmatprep.subr.mxu0 0.0
    %452 = vmatpush1.msra.mxu0 0.0
    %453 = vmatprep.mubr.f32.mxu0 0.0
    %454 = vmatmul.mubr.f32.gmra.mrb[0].mxu0 %v384
    %v455 = vpop.f32.mrb[0].mxu0
    %v456 = vadd.f32 %v375, %v455
    %v457 = vpop.f32.mrb[0].mxu0
    %458 = vmatprep.mubr.f32.mxu0 0.0
    %459 = vmatmul.mubr.f32.gmra.mrb[0].mxu0 %v387
    %v460 = vpop.f32.mrb[0].mxu0
    %v461 = vadd.f32 %v380, %v460
    %v462 = vpop.f32.mrb[0].mxu0
    %463 = vdwg.mxu0
    %v465 = vsel %vm301, %v126, 0
    %v468 = vsel %vm301, %v127, 0
    %470 = vmatprep.subr.mxu0 0.0
    %471 = vmatpush1.msra.mxu0 %v293
    %472 = vmatprep.subr.mxu0 0.0
    %473 = vmatpush1.msra.mxu0 %v298
    %474 = vmatprep.subr.mxu0 0.0
    %475 = vmatpush1.msra.mxu0 0.0
    %476 = vmatprep.subr.mxu0 0.0
    %477 = vmatpush1.msra.mxu0 0.0
    %478 = vmatprep.subr.mxu0 0.0
    %479 = vmatpush1.msra.mxu0 0.0
    %480 = vmatprep.subr.mxu0 0.0
    %481 = vmatpush1.msra.mxu0 0.0
    %482 = vmatprep.subr.mxu0 0.0
    %483 = vmatpush1.msra.mxu0 0.0
    %484 = vmatprep.subr.mxu0 0.0
    %485 = vmatpush1.msra.mxu0 0.0
    %486 = vmatprep.subr.mxu0 0.0
    %487 = vmatpush1.msra.mxu0 0.0
    %488 = vmatprep.subr.mxu0 0.0
    %489 = vmatpush1.msra.mxu0 0.0
    %490 = vmatprep.subr.mxu0 0.0
    %491 = vmatpush1.msra.mxu0 0.0
    %492 = vmatprep.subr.mxu0 0.0
    %493 = vmatpush1.msra.mxu0 0.0
    %494 = vmatprep.subr.mxu0 0.0
    %495 = vmatpush1.msra.mxu0 0.0
    %496 = vmatprep.subr.mxu0 0.0
    %497 = vmatpush1.msra.mxu0 0.0
    %498 = vmatprep.subr.mxu0 0.0
    %499 = vmatpush1.msra.mxu0 0.0
    %500 = vmatprep.subr.mxu0 0.0
    %501 = vmatpush1.msra.mxu0 0.0
    %502 = vmatprep.subr.mxu0 0.0
    %503 = vmatpush1.msra.mxu0 0.0
    %504 = vmatprep.subr.mxu0 0.0
    %505 = vmatpush1.msra.mxu0 0.0
    %506 = vmatprep.subr.mxu0 0.0
    %507 = vmatpush1.msra.mxu0 0.0
    %508 = vmatprep.subr.mxu0 0.0
    %509 = vmatpush1.msra.mxu0 0.0
    %510 = vmatprep.subr.mxu0 0.0
    %511 = vmatpush1.msra.mxu0 0.0
    %512 = vmatprep.subr.mxu0 0.0
    %513 = vmatpush1.msra.mxu0 0.0
    %514 = vmatprep.subr.mxu0 0.0
    %515 = vmatpush1.msra.mxu0 0.0
    %516 = vmatprep.subr.mxu0 0.0
    %517 = vmatpush1.msra.mxu0 0.0
    %518 = vmatprep.subr.mxu0 0.0
    %519 = vmatpush1.msra.mxu0 0.0
    %520 = vmatprep.subr.mxu0 0.0
    %521 = vmatpush1.msra.mxu0 0.0
    %522 = vmatprep.subr.mxu0 0.0
    %523 = vmatpush1.msra.mxu0 0.0
    %524 = vmatprep.subr.mxu0 0.0
    %525 = vmatpush1.msra.mxu0 0.0
    %526 = vmatprep.subr.mxu0 0.0
    %527 = vmatpush1.msra.mxu0 0.0
    %528 = vmatprep.subr.mxu0 0.0
    %529 = vmatpush1.msra.mxu0 0.0
    %530 = vmatprep.subr.mxu0 0.0
    %531 = vmatpush1.msra.mxu0 0.0
    %532 = vmatprep.subr.mxu0 0.0
    %533 = vmatpush1.msra.mxu0 0.0
    %534 = vmatprep.mubr.f32.mxu0 0.0
    %535 = vmatmul.mubr.f32.gmra.mrb[0].mxu0 %v465
    %v536 = vpop.f32.mrb[0].mxu0
    %v537 = vadd.f32 0.0, %v536
    %v538 = vpop.f32.mrb[0].mxu0
    %539 = vmatprep.mubr.f32.mxu0 0.0
    %540 = vmatmul.mubr.f32.gmra.mrb[0].mxu0 %v468
    %v541 = vpop.f32.mrb[0].mxu0
    %v542 = vadd.f32 0.0, %v541
    %v543 = vpop.f32.mrb[0].mxu0
    %544 = vdwg.mxu0
    %v545 = vadd.f32 %v456, %v537
    %v546 = vadd.f32 %v461, %v542
    %v548 = vlaneseq
    %v549 = vshrl.u32 %v548, 7
    %v550 = vsub.s32 0, %v549
    %v551 = vrot.slane %v119, %v550
    %v553 = vadd.f32 %v545, %v551
    %v554 = vadd.f32 %v546, %v551
    %v555 = vxor.u32 %v553, 2147483648
    %v556 = vxor.u32 %v554, 2147483648
    %v557 = vmul.f32 %v555, 1.442695
    %v558 = vpow.pop %v557
    %v559 = vmul.f32 %v556, 1.442695
    %v560 = vpow.pop %v559
    %v561 = vadd.f32 %v558, 1.0
    %v562 = vadd.f32 %v560, 1.0
    %v563 = vrcp.pop %v561
    %v564 = vmul.f32 1.0, %v563
    %v565 = vrcp.pop %v562
    %v566 = vmul.f32 1.0, %v565
    %569 = vrot.lane.b32.xlu0 %v130, 32
    %v570 = vpop.permute.xlu0 %569
    %571 = vrot.lane.b32.xlu0 %v131, 32
    %v572 = vpop.permute.xlu0 %571
    %v575 = vmul.f32 %v564, %v570
    %v576 = vmul.f32 %v566, %v572
    %579 = vrot.lane.b32.xlu0 %v575, 96
    %v580 = vpop.permute.xlu0 %579
    %581 = vrot.lane.b32.xlu0 %v576, 96
    %v582 = vpop.permute.xlu0 %581
    %vm583 = vcmask 261120
    %v584 = vsel %vm583, %v580, 0
    %v586 = vsel %vm583, %v582, 0
    %588 = vmatprep.subr.mxu0 %v108
    %589 = vmatpush1.msra.mxu0 %v107
    %590 = vmatprep.subr.mxu0 %v111
    %591 = vmatpush1.msra.mxu0 %v110
    %592 = vmatprep.subr.mxu0 %v114
    %593 = vmatpush1.msra.mxu0 %v113
    %594 = vmatprep.subr.mxu0 %v117
    %595 = vmatpush1.msra.mxu0 %v116
    %596 = vmatprep.subr.mxu0 0.0
    %597 = vmatpush1.msra.mxu0 0.0
    %598 = vmatprep.subr.mxu0 0.0
    %599 = vmatpush1.msra.mxu0 0.0
    %600 = vmatprep.subr.mxu0 0.0
    %601 = vmatpush1.msra.mxu0 0.0
    %602 = vmatprep.subr.mxu0 0.0
    %603 = vmatpush1.msra.mxu0 0.0
    %604 = vmatprep.subr.mxu0 0.0
    %605 = vmatpush1.msra.mxu0 0.0
    %606 = vmatprep.subr.mxu0 0.0
    %607 = vmatpush1.msra.mxu0 0.0
    %608 = vmatprep.subr.mxu0 0.0
    %609 = vmatpush1.msra.mxu0 0.0
    %610 = vmatprep.subr.mxu0 0.0
    %611 = vmatpush1.msra.mxu0 0.0
    %612 = vmatprep.subr.mxu0 0.0
    %613 = vmatpush1.msra.mxu0 0.0
    %614 = vmatprep.subr.mxu0 0.0
    %615 = vmatpush1.msra.mxu0 0.0
    %616 = vmatprep.subr.mxu0 0.0
    %617 = vmatpush1.msra.mxu0 0.0
    %618 = vmatprep.subr.mxu0 0.0
    %619 = vmatpush1.msra.mxu0 0.0
    %620 = vmatprep.subr.mxu0 0.0
    %621 = vmatpush1.msra.mxu0 0.0
    %622 = vmatprep.subr.mxu0 0.0
    %623 = vmatpush1.msra.mxu0 0.0
    %624 = vmatprep.subr.mxu0 0.0
    %625 = vmatpush1.msra.mxu0 0.0
    %626 = vmatprep.subr.mxu0 0.0
    %627 = vmatpush1.msra.mxu0 0.0
    %628 = vmatprep.subr.mxu0 0.0
    %629 = vmatpush1.msra.mxu0 0.0
    %630 = vmatprep.subr.mxu0 0.0
    %631 = vmatpush1.msra.mxu0 0.0
    %632 = vmatprep.subr.mxu0 0.0
    %633 = vmatpush1.msra.mxu0 0.0
    %634 = vmatprep.subr.mxu0 0.0
    %635 = vmatpush1.msra.mxu0 0.0
    %636 = vmatprep.subr.mxu0 0.0
    %637 = vmatpush1.msra.mxu0 0.0
    %638 = vmatprep.subr.mxu0 0.0
    %639 = vmatpush1.msra.mxu0 0.0
    %640 = vmatprep.subr.mxu0 0.0
    %641 = vmatpush1.msra.mxu0 0.0
    %642 = vmatprep.subr.mxu0 0.0
    %643 = vmatpush1.msra.mxu0 0.0
    %644 = vmatprep.subr.mxu0 0.0
    %645 = vmatpush1.msra.mxu0 0.0
    %646 = vmatprep.subr.mxu0 0.0
    %647 = vmatpush1.msra.mxu0 0.0
    %648 = vmatprep.subr.mxu0 0.0
    %649 = vmatpush1.msra.mxu0 0.0
    %650 = vmatprep.subr.mxu0 0.0
    %651 = vmatpush1.msra.mxu0 0.0
    %652 = vmatprep.mubr.f32.mxu0 0.0
    %653 = vmatmul.mubr.f32.gmra.mrb[0].mxu0 %v584
    %v654 = vpop.f32.mrb[0].mxu0
    %v655 = vadd.f32 0.0, %v654
    %v656 = vpop.f32.mrb[0].mxu0
    %v657 = vadd.f32 0.0, %v656
    %658 = vmatprep.mubr.f32.mxu0 0.0
    %659 = vmatmul.mubr.f32.gmra.mrb[0].mxu0 %v586
    %v660 = vpop.f32.mrb[0].mxu0
    %v661 = vadd.f32 0.0, %v660
    %v662 = vpop.f32.mrb[0].mxu0
    %v663 = vadd.f32 0.0, %v662
    %664 = vdwg.mxu0
    %665 = vmatprep.subr.mxu0 0.0
    %666 = vmatpush1.msra.mxu0 %v109
    %667 = vmatprep.subr.mxu0 0.0
    %668 = vmatpush1.msra.mxu0 %v112
    %669 = vmatprep.subr.mxu0 0.0
    %670 = vmatpush1.msra.mxu0 %v115
    %671 = vmatprep.subr.mxu0 0.0
    %672 = vmatpush1.msra.mxu0 %v118
    %673 = vmatprep.subr.mxu0 0.0
    %674 = vmatpush1.msra.mxu0 0.0
    %675 = vmatprep.subr.mxu0 0.0
    %676 = vmatpush1.msra.mxu0 0.0
    %677 = vmatprep.subr.mxu0 0.0
    %678 = vmatpush1.msra.mxu0 0.0
    %679 = vmatprep.subr.mxu0 0.0
    %680 = vmatpush1.msra.mxu0 0.0
    %681 = vmatprep.subr.mxu0 0.0
    %682 = vmatpush1.msra.mxu0 0.0
    %683 = vmatprep.subr.mxu0 0.0
    %684 = vmatpush1.msra.mxu0 0.0
    %685 = vmatprep.subr.mxu0 0.0
    %686 = vmatpush1.msra.mxu0 0.0
    %687 = vmatprep.subr.mxu0 0.0
    %688 = vmatpush1.msra.mxu0 0.0
    %689 = vmatprep.subr.mxu0 0.0
    %690 = vmatpush1.msra.mxu0 0.0
    %691 = vmatprep.subr.mxu0 0.0
    %692 = vmatpush1.msra.mxu0 0.0
    %693 = vmatprep.subr.mxu0 0.0
    %694 = vmatpush1.msra.mxu0 0.0
    %695 = vmatprep.subr.mxu0 0.0
    %696 = vmatpush1.msra.mxu0 0.0
    %697 = vmatprep.subr.mxu0 0.0
    %698 = vmatpush1.msra.mxu0 0.0
    %699 = vmatprep.subr.mxu0 0.0
    %700 = vmatpush1.msra.mxu0 0.0
    %701 = vmatprep.subr.mxu0 0.0
    %702 = vmatpush1.msra.mxu0 0.0
    %703 = vmatprep.subr.mxu0 0.0
    %704 = vmatpush1.msra.mxu0 0.0
    %705 = vmatprep.subr.mxu0 0.0
    %706 = vmatpush1.msra.mxu0 0.0
    %707 = vmatprep.subr.mxu0 0.0
    %708 = vmatpush1.msra.mxu0 0.0
    %709 = vmatprep.subr.mxu0 0.0
    %710 = vmatpush1.msra.mxu0 0.0
    %711 = vmatprep.subr.mxu0 0.0
    %712 = vmatpush1.msra.mxu0 0.0
    %713 = vmatprep.subr.mxu0 0.0
    %714 = vmatpush1.msra.mxu0 0.0
    %715 = vmatprep.subr.mxu0 0.0
    %716 = vmatpush1.msra.mxu0 0.0
    %717 = vmatprep.subr.mxu0 0.0
    %718 = vmatpush1.msra.mxu0 0.0
    %719 = vmatprep.subr.mxu0 0.0
    %720 = vmatpush1.msra.mxu0 0.0
    %721 = vmatprep.subr.mxu0 0.0
    %722 = vmatpush1.msra.mxu0 0.0
    %723 = vmatprep.subr.mxu0 0.0
    %724 = vmatpush1.msra.mxu0 0.0
    %725 = vmatprep.subr.mxu0 0.0
    %726 = vmatpush1.msra.mxu0 0.0
    %727 = vmatprep.subr.mxu0 0.0
    %728 = vmatpush1.msra.mxu0 0.0
    %729 = vmatprep.mubr.f32.mxu0 0.0
    %730 = vmatmul.mubr.f32.gmra.mrb[0].mxu0 %v584
    %v731 = vpop.f32.mrb[0].mxu0
    %v732 = vadd.f32 0.0, %v731
    %v733 = vpop.f32.mrb[0].mxu0
    %734 = vmatprep.mubr.f32.mxu0 0.0
    %735 = vmatmul.mubr.f32.gmra.mrb[0].mxu0 %v586
    %v736 = vpop.f32.mrb[0].mxu0
    %v737 = vadd.f32 0.0, %v736
    %v738 = vpop.f32.mrb[0].mxu0
    %739 = vdwg.mxu0
    %740 = vmatprep.subr.mxu0 0.0
    %741 = vmatpush1.msra.mxu0 %v657
    %742 = vmatprep.subr.mxu0 0.0
    %743 = vmatpush1.msra.mxu0 %v663
    %744 = vmatprep.subr.mxu0 0.0
    %745 = vmatpush1.msra.mxu0 0.0
    %746 = vmatprep.subr.mxu0 0.0
    %747 = vmatpush1.msra.mxu0 0.0
    %748 = vmatprep.subr.mxu0 0.0
    %749 = vmatpush1.msra.mxu0 0.0
    %750 = vmatprep.subr.mxu0 0.0
    %751 = vmatpush1.msra.mxu0 0.0
    %752 = vmatprep.subr.mxu0 0.0
    %753 = vmatpush1.msra.mxu0 0.0
    %754 = vmatprep.subr.mxu0 0.0
    %755 = vmatpush1.msra.mxu0 0.0
    %756 = vmatprep.subr.mxu0 0.0
    %757 = vmatpush1.msra.mxu0 0.0
    %758 = vmatprep.subr.mxu0 0.0
    %759 = vmatpush1.msra.mxu0 0.0
    %760 = vmatprep.subr.mxu0 0.0
    %761 = vmatpush1.msra.mxu0 0.0
    %762 = vmatprep.subr.mxu0 0.0
    %763 = vmatpush1.msra.mxu0 0.0
    %764 = vmatprep.subr.mxu0 0.0
    %765 = vmatpush1.msra.mxu0 0.0
    %766 = vmatprep.subr.mxu0 0.0
    %767 = vmatpush1.msra.mxu0 0.0
    %768 = vmatprep.subr.mxu0 0.0
    %769 = vmatpush1.msra.mxu0 0.0
    %770 = vmatprep.subr.mxu0 0.0
    %771 = vmatpush1.msra.mxu0 0.0
    %772 = vmatprep.subr.mxu0 0.0
    %773 = vmatpush1.msra.mxu0 0.0
    %774 = vmatprep.subr.mxu0 0.0
    %775 = vmatpush1.msra.mxu0 0.0
    %776 = vmatprep.subr.mxu0 0.0
    %777 = vmatpush1.msra.mxu0 0.0
    %778 = vmatprep.subr.mxu0 0.0
    %779 = vmatpush1.msra.mxu0 0.0
    %780 = vmatprep.subr.mxu0 0.0
    %781 = vmatpush1.msra.mxu0 0.0
    %782 = vmatprep.subr.mxu0 0.0
    %783 = vmatpush1.msra.mxu0 0.0
    %784 = vmatprep.subr.mxu0 0.0
    %785 = vmatpush1.msra.mxu0 0.0
    %786 = vmatprep.subr.mxu0 0.0
    %787 = vmatpush1.msra.mxu0 0.0
    %788 = vmatprep.subr.mxu0 0.0
    %789 = vmatpush1.msra.mxu0 0.0
    %790 = vmatprep.subr.mxu0 0.0
    %791 = vmatpush1.msra.mxu0 0.0
    %792 = vmatprep.subr.mxu0 0.0
    %793 = vmatpush1.msra.mxu0 0.0
    %794 = vmatprep.subr.mxu0 0.0
    %795 = vmatpush1.msra.mxu0 0.0
    %796 = vmatprep.subr.mxu0 0.0
    %797 = vmatpush1.msra.mxu0 0.0
    %798 = vmatprep.subr.mxu0 0.0
    %799 = vmatpush1.msra.mxu0 0.0
    %800 = vmatprep.subr.mxu0 0.0
    %801 = vmatpush1.msra.mxu0 0.0
    %802 = vmatprep.subr.mxu0 0.0
    %803 = vmatpush1.msra.mxu0 0.0
    %804 = vmatprep.mubr.f32.mxu0 0.0
    %805 = vmatmul.mubr.f32.gmra.mrb[0].mxu0 %v303
    %v806 = vpop.f32.mrb[0].mxu0
    %v807 = vadd.f32 0.0, %v806
    %v808 = vpop.f32.mrb[0].mxu0
    %809 = vmatprep.mubr.f32.mxu0 0.0
    %810 = vmatmul.mubr.f32.gmra.mrb[0].mxu0 %v306
    %v811 = vpop.f32.mrb[0].mxu0
    %v812 = vadd.f32 0.0, %v811
    %v813 = vpop.f32.mrb[0].mxu0
    %814 = vdwg.mxu0
    %815 = vmatprep.subr.mxu0 0.0
    %816 = vmatpush1.msra.mxu0 %v655
    %817 = vmatprep.subr.mxu0 0.0
    %818 = vmatpush1.msra.mxu0 %v661
    %819 = vmatprep.subr.mxu0 0.0
    %820 = vmatpush1.msra.mxu0 0.0
    %821 = vmatprep.subr.mxu0 0.0
    %822 = vmatpush1.msra.mxu0 0.0
    %823 = vmatprep.subr.mxu0 0.0
    %824 = vmatpush1.msra.mxu0 0.0
    %825 = vmatprep.subr.mxu0 0.0
    %826 = vmatpush1.msra.mxu0 0.0
    %827 = vmatprep.subr.mxu0 0.0
    %828 = vmatpush1.msra.mxu0 0.0
    %829 = vmatprep.subr.mxu0 0.0
    %830 = vmatpush1.msra.mxu0 0.0
    %831 = vmatprep.subr.mxu0 0.0
    %832 = vmatpush1.msra.mxu0 0.0
    %833 = vmatprep.subr.mxu0 0.0
    %834 = vmatpush1.msra.mxu0 0.0
    %835 = vmatprep.subr.mxu0 0.0
    %836 = vmatpush1.msra.mxu0 0.0
    %837 = vmatprep.subr.mxu0 0.0
    %838 = vmatpush1.msra.mxu0 0.0
    %839 = vmatprep.subr.mxu0 0.0
    %840 = vmatpush1.msra.mxu0 0.0
    %841 = vmatprep.subr.mxu0 0.0
    %842 = vmatpush1.msra.mxu0 0.0
    %843 = vmatprep.subr.mxu0 0.0
    %844 = vmatpush1.msra.mxu0 0.0
    %845 = vmatprep.subr.mxu0 0.0
    %846 = vmatpush1.msra.mxu0 0.0
    %847 = vmatprep.subr.mxu0 0.0
    %848 = vmatpush1.msra.mxu0 0.0
    %849 = vmatprep.subr.mxu0 0.0
    %850 = vmatpush1.msra.mxu0 0.0
    %851 = vmatprep.subr.mxu0 0.0
    %852 = vmatpush1.msra.mxu0 0.0
    %853 = vmatprep.subr.mxu0 0.0
    %854 = vmatpush1.msra.mxu0 0.0
    %855 = vmatprep.subr.mxu0 0.0
    %856 = vmatpush1.msra.mxu0 0.0
    %857 = vmatprep.subr.mxu0 0.0
    %858 = vmatpush1.msra.mxu0 0.0
    %859 = vmatprep.subr.mxu0 0.0
    %860 = vmatpush1.msra.mxu0 0.0
    %861 = vmatprep.subr.mxu0 0.0
    %862 = vmatpush1.msra.mxu0 0.0
    %863 = vmatprep.subr.mxu0 0.0
    %864 = vmatpush1.msra.mxu0 0.0
    %865 = vmatprep.subr.mxu0 0.0
    %866 = vmatpush1.msra.mxu0 0.0
    %867 = vmatprep.subr.mxu0 0.0
    %868 = vmatpush1.msra.mxu0 0.0
    %869 = vmatprep.subr.mxu0 0.0
    %870 = vmatpush1.msra.mxu0 0.0
    %871 = vmatprep.subr.mxu0 0.0
    %872 = vmatpush1.msra.mxu0 0.0
    %873 = vmatprep.subr.mxu0 0.0
    %874 = vmatpush1.msra.mxu0 0.0
    %875 = vmatprep.subr.mxu0 0.0
    %876 = vmatpush1.msra.mxu0 0.0
    %877 = vmatprep.subr.mxu0 0.0
    %878 = vmatpush1.msra.mxu0 0.0
    %879 = vmatprep.mubr.f32.mxu0 0.0
    %880 = vmatmul.mubr.f32.gmra.mrb[0].mxu0 %v384
    %v881 = vpop.f32.mrb[0].mxu0
    %v882 = vadd.f32 %v807, %v881
    %v883 = vpop.f32.mrb[0].mxu0
    %884 = vmatprep.mubr.f32.mxu0 0.0
    %885 = vmatmul.mubr.f32.gmra.mrb[0].mxu0 %v387
    %v886 = vpop.f32.mrb[0].mxu0
    %v887 = vadd.f32 %v812, %v886
    %v888 = vpop.f32.mrb[0].mxu0
    %889 = vdwg.mxu0
    %890 = vmatprep.subr.mxu0 0.0
    %891 = vmatpush1.msra.mxu0 %v732
    %892 = vmatprep.subr.mxu0 0.0
    %893 = vmatpush1.msra.mxu0 %v737
    %894 = vmatprep.subr.mxu0 0.0
    %895 = vmatpush1.msra.mxu0 0.0
    %896 = vmatprep.subr.mxu0 0.0
    %897 = vmatpush1.msra.mxu0 0.0
    %898 = vmatprep.subr.mxu0 0.0
    %899 = vmatpush1.msra.mxu0 0.0
    %900 = vmatprep.subr.mxu0 0.0
    %901 = vmatpush1.msra.mxu0 0.0
    %902 = vmatprep.subr.mxu0 0.0
    %903 = vmatpush1.msra.mxu0 0.0
    %904 = vmatprep.subr.mxu0 0.0
    %905 = vmatpush1.msra.mxu0 0.0
    %906 = vmatprep.subr.mxu0 0.0
    %907 = vmatpush1.msra.mxu0 0.0
    %908 = vmatprep.subr.mxu0 0.0
    %909 = vmatpush1.msra.mxu0 0.0
    %910 = vmatprep.subr.mxu0 0.0
    %911 = vmatpush1.msra.mxu0 0.0
    %912 = vmatprep.subr.mxu0 0.0
    %913 = vmatpush1.msra.mxu0 0.0
    %914 = vmatprep.subr.mxu0 0.0
    %915 = vmatpush1.msra.mxu0 0.0
    %916 = vmatprep.subr.mxu0 0.0
    %917 = vmatpush1.msra.mxu0 0.0
    %918 = vmatprep.subr.mxu0 0.0
    %919 = vmatpush1.msra.mxu0 0.0
    %920 = vmatprep.subr.mxu0 0.0
    %921 = vmatpush1.msra.mxu0 0.0
    %922 = vmatprep.subr.mxu0 0.0
    %923 = vmatpush1.msra.mxu0 0.0
    %924 = vmatprep.subr.mxu0 0.0
    %925 = vmatpush1.msra.mxu0 0.0
    %926 = vmatprep.subr.mxu0 0.0
    %927 = vmatpush1.msra.mxu0 0.0
    %928 = vmatprep.subr.mxu0 0.0
    %929 = vmatpush1.msra.mxu0 0.0
    %930 = vmatprep.subr.mxu0 0.0
    %931 = vmatpush1.msra.mxu0 0.0
    %932 = vmatprep.subr.mxu0 0.0
    %933 = vmatpush1.msra.mxu0 0.0
    %934 = vmatprep.subr.mxu0 0.0
    %935 = vmatpush1.msra.mxu0 0.0
    %936 = vmatprep.subr.mxu0 0.0
    %937 = vmatpush1.msra.mxu0 0.0
    %938 = vmatprep.subr.mxu0 0.0
    %939 = vmatpush1.msra.mxu0 0.0
    %940 = vmatprep.subr.mxu0 0.0
    %941 = vmatpush1.msra.mxu0 0.0
    %942 = vmatprep.subr.mxu0 0.0
    %943 = vmatpush1.msra.mxu0 0.0
    %944 = vmatprep.subr.mxu0 0.0
    %945 = vmatpush1.msra.mxu0 0.0
    %946 = vmatprep.subr.mxu0 0.0
    %947 = vmatpush1.msra.mxu0 0.0
    %948 = vmatprep.subr.mxu0 0.0
    %949 = vmatpush1.msra.mxu0 0.0
    %950 = vmatprep.subr.mxu0 0.0
    %951 = vmatpush1.msra.mxu0 0.0
    %952 = vmatprep.subr.mxu0 0.0
    %953 = vmatpush1.msra.mxu0 0.0
    %954 = vmatprep.mubr.f32.mxu0 0.0
    %955 = vmatmul.mubr.f32.gmra.mrb[0].mxu0 %v465
    %v956 = vpop.f32.mrb[0].mxu0
    %v957 = vadd.f32 0.0, %v956
    %v958 = vpop.f32.mrb[0].mxu0
    %959 = vmatprep.mubr.f32.mxu0 0.0
    %960 = vmatmul.mubr.f32.gmra.mrb[0].mxu0 %v468
    %v961 = vpop.f32.mrb[0].mxu0
    %v962 = vadd.f32 0.0, %v961
    %v963 = vpop.f32.mrb[0].mxu0
    %964 = vdwg.mxu0
    %v965 = vadd.f32 %v882, %v957
    %v966 = vadd.f32 %v887, %v962
    %969 = vrot.lane.b32.xlu0 %v965, 64
    %v970 = vpop.permute.xlu0 %969
    %971 = vrot.lane.b32.xlu0 %v966, 64
    %v972 = vpop.permute.xlu0 %971
    %v975 = vadd.f32 %v553, %v970
    %v976 = vadd.f32 %v554, %v972
    %v977 = vtanh.pop %v975
    %v978 = vtanh.pop %v976
    %981 = vrot.lane.b32.xlu0 %v977, 64
    %v982 = vpop.permute.xlu0 %981
    %983 = vrot.lane.b32.xlu0 %v978, 64
    %v984 = vpop.permute.xlu0 %983
    %v987 = vmul.f32 %v564, %v982
    %v988 = vmul.f32 %v566, %v984
    %v989 = vsub.f32 1.0, %v564
    %v990 = vsub.f32 1.0, %v566
    %v991 = vmul.f32 %v989, %v130
    %v992 = vmul.f32 %v990, %v131
    %v993 = vadd.f32 %v987, %v991
    %v994 = vadd.f32 %v988, %v992
    %995 = vst.msk [vmem:[#allocation11] sm:$0xff] %vm583, %v993
    %996 = vst.msk [vmem:[#allocation11 + $0x8] sm:$0xff] %vm583, %v994
    %s997 = scalar_lea.vmem [#allocation5], 16
    %v998 = vld [vmem:[%s997] sm:$0xff]
    %v999 = vld [vmem:[%s997 + $0x8] sm:$0xff]
    %s1000 = scalar_lea.vmem [#allocation7], 16
    %v1001 = vld [vmem:[%s1000] sm:$0xff]
    %v1002 = vld [vmem:[%s1000 + $0x8] sm:$0xff]
    %v1004 = vsel %vm132, %v998, 0
    %v1007 = vsel %vm132, %v999, 0
    %1009 = vmatprep.subr.mxu0 %v93
    %1010 = vmatpush1.msra.mxu0 %v92
    %1011 = vmatprep.subr.mxu0 %v96
    %1012 = vmatpush1.msra.mxu0 %v95
    %1013 = vmatprep.subr.mxu0 %v99
    %1014 = vmatpush1.msra.mxu0 %v98
    %1015 = vmatprep.subr.mxu0 %v102
    %1016 = vmatpush1.msra.mxu0 %v101
    %1017 = vmatprep.subr.mxu0 %v144
    %1018 = vmatpush1.msra.mxu0 %v141
    %1019 = vmatprep.subr.mxu0 0.0
    %1020 = vmatpush1.msra.mxu0 0.0
    %1021 = vmatprep.subr.mxu0 0.0
    %1022 = vmatpush1.msra.mxu0 0.0
    %1023 = vmatprep.subr.mxu0 0.0
    %1024 = vmatpush1.msra.mxu0 0.0
    %1025 = vmatprep.subr.mxu0 0.0
    %1026 = vmatpush1.msra.mxu0 0.0
    %1027 = vmatprep.subr.mxu0 0.0
    %1028 = vmatpush1.msra.mxu0 0.0
    %1029 = vmatprep.subr.mxu0 0.0
    %1030 = vmatpush1.msra.mxu0 0.0
    %1031 = vmatprep.subr.mxu0 0.0
    %1032 = vmatpush1.msra.mxu0 0.0
    %1033 = vmatprep.subr.mxu0 0.0
    %1034 = vmatpush1.msra.mxu0 0.0
    %1035 = vmatprep.subr.mxu0 0.0
    %1036 = vmatpush1.msra.mxu0 0.0
    %1037 = vmatprep.subr.mxu0 0.0
    %1038 = vmatpush1.msra.mxu0 0.0
    %1039 = vmatprep.subr.mxu0 0.0
    %1040 = vmatpush1.msra.mxu0 0.0
    %1041 = vmatprep.subr.mxu0 0.0
    %1042 = vmatpush1.msra.mxu0 0.0
    %1043 = vmatprep.subr.mxu0 0.0
    %1044 = vmatpush1.msra.mxu0 0.0
    %1045 = vmatprep.subr.mxu0 0.0
    %1046 = vmatpush1.msra.mxu0 0.0
    %1047 = vmatprep.subr.mxu0 0.0
    %1048 = vmatpush1.msra.mxu0 0.0
    %1049 = vmatprep.subr.mxu0 0.0
    %1050 = vmatpush1.msra.mxu0 0.0
    %1051 = vmatprep.subr.mxu0 0.0
    %1052 = vmatpush1.msra.mxu0 0.0
    %1053 = vmatprep.subr.mxu0 0.0
    %1054 = vmatpush1.msra.mxu0 0.0
    %1055 = vmatprep.subr.mxu0 0.0
    %1056 = vmatpush1.msra.mxu0 0.0
    %1057 = vmatprep.subr.mxu0 0.0
    %1058 = vmatpush1.msra.mxu0 0.0
    %1059 = vmatprep.subr.mxu0 0.0
    %1060 = vmatpush1.msra.mxu0 0.0
    %1061 = vmatprep.subr.mxu0 0.0
    %1062 = vmatpush1.msra.mxu0 0.0
    %1063 = vmatprep.subr.mxu0 0.0
    %1064 = vmatpush1.msra.mxu0 0.0
    %1065 = vmatprep.subr.mxu0 0.0
    %1066 = vmatpush1.msra.mxu0 0.0
    %1067 = vmatprep.subr.mxu0 0.0
    %1068 = vmatpush1.msra.mxu0 0.0
    %1069 = vmatprep.subr.mxu0 0.0
    %1070 = vmatpush1.msra.mxu0 0.0
    %1071 = vmatprep.subr.mxu0 0.0
    %1072 = vmatpush1.msra.mxu0 0.0
    %1073 = vmatprep.mubr.f32.mxu0 0.0
    %1074 = vmatmul.mubr.f32.gmra.mrb[0].mxu0 %v1004
    %v1075 = vpop.f32.mrb[0].mxu0
    %v1076 = vadd.f32 0.0, %v1075
    %v1077 = vpop.f32.mrb[0].mxu0
    %v1078 = vadd.f32 0.0, %v1077
    %1079 = vmatprep.mubr.f32.mxu0 0.0
    %1080 = vmatmul.mubr.f32.gmra.mrb[0].mxu0 %v1007
    %v1081 = vpop.f32.mrb[0].mxu0
    %v1082 = vadd.f32 0.0, %v1081
    %v1083 = vpop.f32.mrb[0].mxu0
    %v1084 = vadd.f32 0.0, %v1083
    %1085 = vdwg.mxu0
    %1086 = vmatprep.subr.mxu0 0.0
    %1087 = vmatpush1.msra.mxu0 %v94
    %1088 = vmatprep.subr.mxu0 0.0
    %1089 = vmatpush1.msra.mxu0 %v97
    %1090 = vmatprep.subr.mxu0 0.0
    %1091 = vmatpush1.msra.mxu0 %v100
    %1092 = vmatprep.subr.mxu0 0.0
    %1093 = vmatpush1.msra.mxu0 %v103
    %1094 = vmatprep.subr.mxu0 0.0
    %1095 = vmatpush1.msra.mxu0 %v147
    %1096 = vmatprep.subr.mxu0 0.0
    %1097 = vmatpush1.msra.mxu0 0.0
    %1098 = vmatprep.subr.mxu0 0.0
    %1099 = vmatpush1.msra.mxu0 0.0
    %1100 = vmatprep.subr.mxu0 0.0
    %1101 = vmatpush1.msra.mxu0 0.0
    %1102 = vmatprep.subr.mxu0 0.0
    %1103 = vmatpush1.msra.mxu0 0.0
    %1104 = vmatprep.subr.mxu0 0.0
    %1105 = vmatpush1.msra.mxu0 0.0
    %1106 = vmatprep.subr.mxu0 0.0
    %1107 = vmatpush1.msra.mxu0 0.0
    %1108 = vmatprep.subr.mxu0 0.0
    %1109 = vmatpush1.msra.mxu0 0.0
    %1110 = vmatprep.subr.mxu0 0.0
    %1111 = vmatpush1.msra.mxu0 0.0
    %1112 = vmatprep.subr.mxu0 0.0
    %1113 = vmatpush1.msra.mxu0 0.0
    %1114 = vmatprep.subr.mxu0 0.0
    %1115 = vmatpush1.msra.mxu0 0.0
    %1116 = vmatprep.subr.mxu0 0.0
    %1117 = vmatpush1.msra.mxu0 0.0
    %1118 = vmatprep.subr.mxu0 0.0
    %1119 = vmatpush1.msra.mxu0 0.0
    %1120 = vmatprep.subr.mxu0 0.0
    %1121 = vmatpush1.msra.mxu0 0.0
    %1122 = vmatprep.subr.mxu0 0.0
    %1123 = vmatpush1.msra.mxu0 0.0
    %1124 = vmatprep.subr.mxu0 0.0
    %1125 = vmatpush1.msra.mxu0 0.0
    %1126 = vmatprep.subr.mxu0 0.0
    %1127 = vmatpush1.msra.mxu0 0.0
    %1128 = vmatprep.subr.mxu0 0.0
    %1129 = vmatpush1.msra.mxu0 0.0
    %1130 = vmatprep.subr.mxu0 0.0
    %1131 = vmatpush1.msra.mxu0 0.0
    %1132 = vmatprep.subr.mxu0 0.0
    %1133 = vmatpush1.msra.mxu0 0.0
    %1134 = vmatprep.subr.mxu0 0.0
    %1135 = vmatpush1.msra.mxu0 0.0
    %1136 = vmatprep.subr.mxu0 0.0
    %1137 = vmatpush1.msra.mxu0 0.0
    %1138 = vmatprep.subr.mxu0 0.0
    %1139 = vmatpush1.msra.mxu0 0.0
    %1140 = vmatprep.subr.mxu0 0.0
    %1141 = vmatpush1.msra.mxu0 0.0
    %1142 = vmatprep.subr.mxu0 0.0
    %1143 = vmatpush1.msra.mxu0 0.0
    %1144 = vmatprep.subr.mxu0 0.0
    %1145 = vmatpush1.msra.mxu0 0.0
    %1146 = vmatprep.subr.mxu0 0.0
    %1147 = vmatpush1.msra.mxu0 0.0
    %1148 = vmatprep.subr.mxu0 0.0
    %1149 = vmatpush1.msra.mxu0 0.0
    %1150 = vmatprep.mubr.f32.mxu0 0.0
    %1151 = vmatmul.mubr.f32.gmra.mrb[0].mxu0 %v1004
    %v1152 = vpop.f32.mrb[0].mxu0
    %v1153 = vadd.f32 0.0, %v1152
    %v1154 = vpop.f32.mrb[0].mxu0
    %1155 = vmatprep.mubr.f32.mxu0 0.0
    %1156 = vmatmul.mubr.f32.gmra.mrb[0].mxu0 %v1007
    %v1157 = vpop.f32.mrb[0].mxu0
    %v1158 = vadd.f32 0.0, %v1157
    %v1159 = vpop.f32.mrb[0].mxu0
    %1160 = vdwg.mxu0
    %1161 = vmatprep.subr.mxu0 0.0
    %1162 = vmatpush1.msra.mxu0 %v1078
    %1163 = vmatprep.subr.mxu0 0.0
    %1164 = vmatpush1.msra.mxu0 %v1084
    %1165 = vmatprep.subr.mxu0 0.0
    %1166 = vmatpush1.msra.mxu0 0.0
    %1167 = vmatprep.subr.mxu0 0.0
    %1168 = vmatpush1.msra.mxu0 0.0
    %1169 = vmatprep.subr.mxu0 0.0
    %1170 = vmatpush1.msra.mxu0 0.0
    %1171 = vmatprep.subr.mxu0 0.0
    %1172 = vmatpush1.msra.mxu0 0.0
    %1173 = vmatprep.subr.mxu0 0.0
    %1174 = vmatpush1.msra.mxu0 0.0
    %1175 = vmatprep.subr.mxu0 0.0
    %1176 = vmatpush1.msra.mxu0 0.0
    %1177 = vmatprep.subr.mxu0 0.0
    %1178 = vmatpush1.msra.mxu0 0.0
    %1179 = vmatprep.subr.mxu0 0.0
    %1180 = vmatpush1.msra.mxu0 0.0
    %1181 = vmatprep.subr.mxu0 0.0
    %1182 = vmatpush1.msra.mxu0 0.0
    %1183 = vmatprep.subr.mxu0 0.0
    %1184 = vmatpush1.msra.mxu0 0.0
    %1185 = vmatprep.subr.mxu0 0.0
    %1186 = vmatpush1.msra.mxu0 0.0
    %1187 = vmatprep.subr.mxu0 0.0
    %1188 = vmatpush1.msra.mxu0 0.0
    %1189 = vmatprep.subr.mxu0 0.0
    %1190 = vmatpush1.msra.mxu0 0.0
    %1191 = vmatprep.subr.mxu0 0.0
    %1192 = vmatpush1.msra.mxu0 0.0
    %1193 = vmatprep.subr.mxu0 0.0
    %1194 = vmatpush1.msra.mxu0 0.0
    %1195 = vmatprep.subr.mxu0 0.0
    %1196 = vmatpush1.msra.mxu0 0.0
    %1197 = vmatprep.subr.mxu0 0.0
    %1198 = vmatpush1.msra.mxu0 0.0
    %1199 = vmatprep.subr.mxu0 0.0
    %1200 = vmatpush1.msra.mxu0 0.0
    %1201 = vmatprep.subr.mxu0 0.0
    %1202 = vmatpush1.msra.mxu0 0.0
    %1203 = vmatprep.subr.mxu0 0.0
    %1204 = vmatpush1.msra.mxu0 0.0
    %1205 = vmatprep.subr.mxu0 0.0
    %1206 = vmatpush1.msra.mxu0 0.0
    %1207 = vmatprep.subr.mxu0 0.0
    %1208 = vmatpush1.msra.mxu0 0.0
    %1209 = vmatprep.subr.mxu0 0.0
    %1210 = vmatpush1.msra.mxu0 0.0
    %1211 = vmatprep.subr.mxu0 0.0
    %1212 = vmatpush1.msra.mxu0 0.0
    %1213 = vmatprep.subr.mxu0 0.0
    %1214 = vmatpush1.msra.mxu0 0.0
    %1215 = vmatprep.subr.mxu0 0.0
    %1216 = vmatpush1.msra.mxu0 0.0
    %1217 = vmatprep.subr.mxu0 0.0
    %1218 = vmatpush1.msra.mxu0 0.0
    %1219 = vmatprep.subr.mxu0 0.0
    %1220 = vmatpush1.msra.mxu0 0.0
    %1221 = vmatprep.subr.mxu0 0.0
    %1222 = vmatpush1.msra.mxu0 0.0
    %1223 = vmatprep.subr.mxu0 0.0
    %1224 = vmatpush1.msra.mxu0 0.0
    %1225 = vmatprep.mubr.f32.mxu0 0.0
    %1226 = vmatmul.mubr.f32.gmra.mrb[0].mxu0 %v303
    %v1227 = vpop.f32.mrb[0].mxu0
    %v1228 = vadd.f32 0.0, %v1227
    %v1229 = vpop.f32.mrb[0].mxu0
    %1230 = vmatprep.mubr.f32.mxu0 0.0
    %1231 = vmatmul.mubr.f32.gmra.mrb[0].mxu0 %v306
    %v1232 = vpop.f32.mrb[0].mxu0
    %v1233 = vadd.f32 0.0, %v1232
    %v1234 = vpop.f32.mrb[0].mxu0
    %1235 = vdwg.mxu0
    %1236 = vmatprep.subr.mxu0 0.0
    %1237 = vmatpush1.msra.mxu0 %v1076
    %1238 = vmatprep.subr.mxu0 0.0
    %1239 = vmatpush1.msra.mxu0 %v1082
    %1240 = vmatprep.subr.mxu0 0.0
    %1241 = vmatpush1.msra.mxu0 0.0
    %1242 = vmatprep.subr.mxu0 0.0
    %1243 = vmatpush1.msra.mxu0 0.0
    %1244 = vmatprep.subr.mxu0 0.0
    %1245 = vmatpush1.msra.mxu0 0.0
    %1246 = vmatprep.subr.mxu0 0.0
    %1247 = vmatpush1.msra.mxu0 0.0
    %1248 = vmatprep.subr.mxu0 0.0
    %1249 = vmatpush1.msra.mxu0 0.0
    %1250 = vmatprep.subr.mxu0 0.0
    %1251 = vmatpush1.msra.mxu0 0.0
    %1252 = vmatprep.subr.mxu0 0.0
    %1253 = vmatpush1.msra.mxu0 0.0
    %1254 = vmatprep.subr.mxu0 0.0
    %1255 = vmatpush1.msra.mxu0 0.0
    %1256 = vmatprep.subr.mxu0 0.0
    %1257 = vmatpush1.msra.mxu0 0.0
    %1258 = vmatprep.subr.mxu0 0.0
    %1259 = vmatpush1.msra.mxu0 0.0
    %1260 = vmatprep.subr.mxu0 0.0
    %1261 = vmatpush1.msra.mxu0 0.0
    %1262 = vmatprep.subr.mxu0 0.0
    %1263 = vmatpush1.msra.mxu0 0.0
    %1264 = vmatprep.subr.mxu0 0.0
    %1265 = vmatpush1.msra.mxu0 0.0
    %1266 = vmatprep.subr.mxu0 0.0
    %1267 = vmatpush1.msra.mxu0 0.0
    %1268 = vmatprep.subr.mxu0 0.0
    %1269 = vmatpush1.msra.mxu0 0.0
    %1270 = vmatprep.subr.mxu0 0.0
    %1271 = vmatpush1.msra.mxu0 0.0
    %1272 = vmatprep.subr.mxu0 0.0
    %1273 = vmatpush1.msra.mxu0 0.0
    %1274 = vmatprep.subr.mxu0 0.0
    %1275 = vmatpush1.msra.mxu0 0.0
    %1276 = vmatprep.subr.mxu0 0.0
    %1277 = vmatpush1.msra.mxu0 0.0
    %1278 = vmatprep.subr.mxu0 0.0
    %1279 = vmatpush1.msra.mxu0 0.0
    %1280 = vmatprep.subr.mxu0 0.0
    %1281 = vmatpush1.msra.mxu0 0.0
    %1282 = vmatprep.subr.mxu0 0.0
    %1283 = vmatpush1.msra.mxu0 0.0
    %1284 = vmatprep.subr.mxu0 0.0
    %1285 = vmatpush1.msra.mxu0 0.0
    %1286 = vmatprep.subr.mxu0 0.0
    %1287 = vmatpush1.msra.mxu0 0.0
    %1288 = vmatprep.subr.mxu0 0.0
    %1289 = vmatpush1.msra.mxu0 0.0
    %1290 = vmatprep.subr.mxu0 0.0
    %1291 = vmatpush1.msra.mxu0 0.0
    %1292 = vmatprep.subr.mxu0 0.0
    %1293 = vmatpush1.msra.mxu0 0.0
    %1294 = vmatprep.subr.mxu0 0.0
    %1295 = vmatpush1.msra.mxu0 0.0
    %1296 = vmatprep.subr.mxu0 0.0
    %1297 = vmatpush1.msra.mxu0 0.0
    %1298 = vmatprep.subr.mxu0 0.0
    %1299 = vmatpush1.msra.mxu0 0.0
    %1300 = vmatprep.mubr.f32.mxu0 0.0
    %1301 = vmatmul.mubr.f32.gmra.mrb[0].mxu0 %v384
    %v1302 = vpop.f32.mrb[0].mxu0
    %v1303 = vadd.f32 %v1228, %v1302
    %v1304 = vpop.f32.mrb[0].mxu0
    %1305 = vmatprep.mubr.f32.mxu0 0.0
    %1306 = vmatmul.mubr.f32.gmra.mrb[0].mxu0 %v387
    %v1307 = vpop.f32.mrb[0].mxu0
    %v1308 = vadd.f32 %v1233, %v1307
    %v1309 = vpop.f32.mrb[0].mxu0
    %1310 = vdwg.mxu0
    %1311 = vmatprep.subr.mxu0 0.0
    %1312 = vmatpush1.msra.mxu0 %v1153
    %1313 = vmatprep.subr.mxu0 0.0
    %1314 = vmatpush1.msra.mxu0 %v1158
    %1315 = vmatprep.subr.mxu0 0.0
    %1316 = vmatpush1.msra.mxu0 0.0
    %1317 = vmatprep.subr.mxu0 0.0
    %1318 = vmatpush1.msra.mxu0 0.0
    %1319 = vmatprep.subr.mxu0 0.0
    %1320 = vmatpush1.msra.mxu0 0.0
    %1321 = vmatprep.subr.mxu0 0.0
    %1322 = vmatpush1.msra.mxu0 0.0
    %1323 = vmatprep.subr.mxu0 0.0
    %1324 = vmatpush1.msra.mxu0 0.0
    %1325 = vmatprep.subr.mxu0 0.0
    %1326 = vmatpush1.msra.mxu0 0.0
    %1327 = vmatprep.subr.mxu0 0.0
    %1328 = vmatpush1.msra.mxu0 0.0
    %1329 = vmatprep.subr.mxu0 0.0
    %1330 = vmatpush1.msra.mxu0 0.0
    %1331 = vmatprep.subr.mxu0 0.0
    %1332 = vmatpush1.msra.mxu0 0.0
    %1333 = vmatprep.subr.mxu0 0.0
    %1334 = vmatpush1.msra.mxu0 0.0
    %1335 = vmatprep.subr.mxu0 0.0
    %1336 = vmatpush1.msra.mxu0 0.0
    %1337 = vmatprep.subr.mxu0 0.0
    %1338 = vmatpush1.msra.mxu0 0.0
    %1339 = vmatprep.subr.mxu0 0.0
    %1340 = vmatpush1.msra.mxu0 0.0
    %1341 = vmatprep.subr.mxu0 0.0
    %1342 = vmatpush1.msra.mxu0 0.0
    %1343 = vmatprep.subr.mxu0 0.0
    %1344 = vmatpush1.msra.mxu0 0.0
    %1345 = vmatprep.subr.mxu0 0.0
    %1346 = vmatpush1.msra.mxu0 0.0
    %1347 = vmatprep.subr.mxu0 0.0
    %1348 = vmatpush1.msra.mxu0 0.0
    %1349 = vmatprep.subr.mxu0 0.0
    %1350 = vmatpush1.msra.mxu0 0.0
    %1351 = vmatprep.subr.mxu0 0.0
    %1352 = vmatpush1.msra.mxu0 0.0
    %1353 = vmatprep.subr.mxu0 0.0
    %1354 = vmatpush1.msra.mxu0 0.0
    %1355 = vmatprep.subr.mxu0 0.0
    %1356 = vmatpush1.msra.mxu0 0.0
    %1357 = vmatprep.subr.mxu0 0.0
    %1358 = vmatpush1.msra.mxu0 0.0
    %1359 = vmatprep.subr.mxu0 0.0
    %1360 = vmatpush1.msra.mxu0 0.0
    %1361 = vmatprep.subr.mxu0 0.0
    %1362 = vmatpush1.msra.mxu0 0.0
    %1363 = vmatprep.subr.mxu0 0.0
    %1364 = vmatpush1.msra.mxu0 0.0
    %1365 = vmatprep.subr.mxu0 0.0
    %1366 = vmatpush1.msra.mxu0 0.0
    %1367 = vmatprep.subr.mxu0 0.0
    %1368 = vmatpush1.msra.mxu0 0.0
    %1369 = vmatprep.subr.mxu0 0.0
    %1370 = vmatpush1.msra.mxu0 0.0
    %1371 = vmatprep.subr.mxu0 0.0
    %1372 = vmatpush1.msra.mxu0 0.0
    %1373 = vmatprep.subr.mxu0 0.0
    %1374 = vmatpush1.msra.mxu0 0.0
    %1375 = vmatprep.mubr.f32.mxu0 0.0
    %1376 = vmatmul.mubr.f32.gmra.mrb[0].mxu0 %v465
    %v1377 = vpop.f32.mrb[0].mxu0
    %v1378 = vadd.f32 0.0, %v1377
    %v1379 = vpop.f32.mrb[0].mxu0
    %1380 = vmatprep.mubr.f32.mxu0 0.0
    %1381 = vmatmul.mubr.f32.gmra.mrb[0].mxu0 %v468
    %v1382 = vpop.f32.mrb[0].mxu0
    %v1383 = vadd.f32 0.0, %v1382
    %v1384 = vpop.f32.mrb[0].mxu0
    %1385 = vdwg.mxu0
    %v1386 = vadd.f32 %v1303, %v1378
    %v1387 = vadd.f32 %v1308, %v1383
    %v1388 = vadd.f32 %v1386, %v551
    %v1389 = vadd.f32 %v1387, %v551
    %v1390 = vxor.u32 %v1388, 2147483648
    %v1391 = vxor.u32 %v1389, 2147483648
    %v1392 = vmul.f32 %v1390, 1.442695
    %v1393 = vpow.pop %v1392
    %v1394 = vmul.f32 %v1391, 1.442695
    %v1395 = vpow.pop %v1394
    %v1396 = vadd.f32 %v1393, 1.0
    %v1397 = vadd.f32 %v1395, 1.0
    %v1398 = vrcp.pop %v1396
    %v1399 = vmul.f32 1.0, %v1398
    %v1400 = vrcp.pop %v1397
    %v1401 = vmul.f32 1.0, %v1400
    %1404 = vrot.lane.b32.xlu0 %v1001, 32
    %v1405 = vpop.permute.xlu0 %1404
    %1406 = vrot.lane.b32.xlu0 %v1002, 32
    %v1407 = vpop.permute.xlu0 %1406
    %v1410 = vmul.f32 %v1399, %v1405
    %v1411 = vmul.f32 %v1401, %v1407
    %1414 = vrot.lane.b32.xlu0 %v1410, 96
    %v1415 = vpop.permute.xlu0 %1414
    %1416 = vrot.lane.b32.xlu0 %v1411, 96
    %v1417 = vpop.permute.xlu0 %1416
    %v1418 = vsel %vm583, %v1415, 0
    %v1420 = vsel %vm583, %v1417, 0
    %1422 = vmatprep.subr.mxu0 %v108
    %1423 = vmatpush1.msra.mxu0 %v107
    %1424 = vmatprep.subr.mxu0 %v111
    %1425 = vmatpush1.msra.mxu0 %v110
    %1426 = vmatprep.subr.mxu0 %v114
    %1427 = vmatpush1.msra.mxu0 %v113
    %1428 = vmatprep.subr.mxu0 %v117
    %1429 = vmatpush1.msra.mxu0 %v116
    %1430 = vmatprep.subr.mxu0 0.0
    %1431 = vmatpush1.msra.mxu0 0.0
    %1432 = vmatprep.subr.mxu0 0.0
    %1433 = vmatpush1.msra.mxu0 0.0
    %1434 = vmatprep.subr.mxu0 0.0
    %1435 = vmatpush1.msra.mxu0 0.0
    %1436 = vmatprep.subr.mxu0 0.0
    %1437 = vmatpush1.msra.mxu0 0.0
    %1438 = vmatprep.subr.mxu0 0.0
    %1439 = vmatpush1.msra.mxu0 0.0
    %1440 = vmatprep.subr.mxu0 0.0
    %1441 = vmatpush1.msra.mxu0 0.0
    %1442 = vmatprep.subr.mxu0 0.0
    %1443 = vmatpush1.msra.mxu0 0.0
    %1444 = vmatprep.subr.mxu0 0.0
    %1445 = vmatpush1.msra.mxu0 0.0
    %1446 = vmatprep.subr.mxu0 0.0
    %1447 = vmatpush1.msra.mxu0 0.0
    %1448 = vmatprep.subr.mxu0 0.0
    %1449 = vmatpush1.msra.mxu0 0.0
    %1450 = vmatprep.subr.mxu0 0.0
    %1451 = vmatpush1.msra.mxu0 0.0
    %1452 = vmatprep.subr.mxu0 0.0
    %1453 = vmatpush1.msra.mxu0 0.0
    %1454 = vmatprep.subr.mxu0 0.0
    %1455 = vmatpush1.msra.mxu0 0.0
    %1456 = vmatprep.subr.mxu0 0.0
    %1457 = vmatpush1.msra.mxu0 0.0
    %1458 = vmatprep.subr.mxu0 0.0
    %1459 = vmatpush1.msra.mxu0 0.0
    %1460 = vmatprep.subr.mxu0 0.0
    %1461 = vmatpush1.msra.mxu0 0.0
    %1462 = vmatprep.subr.mxu0 0.0
    %1463 = vmatpush1.msra.mxu0 0.0
    %1464 = vmatprep.subr.mxu0 0.0
    %1465 = vmatpush1.msra.mxu0 0.0
    %1466 = vmatprep.subr.mxu0 0.0
    %1467 = vmatpush1.msra.mxu0 0.0
    %1468 = vmatprep.subr.mxu0 0.0
    %1469 = vmatpush1.msra.mxu0 0.0
    %1470 = vmatprep.subr.mxu0 0.0
    %1471 = vmatpush1.msra.mxu0 0.0
    %1472 = vmatprep.subr.mxu0 0.0
    %1473 = vmatpush1.msra.mxu0 0.0
    %1474 = vmatprep.subr.mxu0 0.0
    %1475 = vmatpush1.msra.mxu0 0.0
    %1476 = vmatprep.subr.mxu0 0.0
    %1477 = vmatpush1.msra.mxu0 0.0
    %1478 = vmatprep.subr.mxu0 0.0
    %1479 = vmatpush1.msra.mxu0 0.0
    %1480 = vmatprep.subr.mxu0 0.0
    %1481 = vmatpush1.msra.mxu0 0.0
    %1482 = vmatprep.subr.mxu0 0.0
    %1483 = vmatpush1.msra.mxu0 0.0
    %1484 = vmatprep.subr.mxu0 0.0
    %1485 = vmatpush1.msra.mxu0 0.0
    %1486 = vmatprep.mubr.f32.mxu0 0.0
    %1487 = vmatmul.mubr.f32.gmra.mrb[0].mxu0 %v1418
    %v1488 = vpop.f32.mrb[0].mxu0
    %v1489 = vadd.f32 0.0, %v1488
    %v1490 = vpop.f32.mrb[0].mxu0
    %v1491 = vadd.f32 0.0, %v1490
    %1492 = vmatprep.mubr.f32.mxu0 0.0
    %1493 = vmatmul.mubr.f32.gmra.mrb[0].mxu0 %v1420
    %v1494 = vpop.f32.mrb[0].mxu0
    %v1495 = vadd.f32 0.0, %v1494
    %v1496 = vpop.f32.mrb[0].mxu0
    %v1497 = vadd.f32 0.0, %v1496
    %1498 = vdwg.mxu0
    %1499 = vmatprep.subr.mxu0 0.0
    %1500 = vmatpush1.msra.mxu0 %v109
    %1501 = vmatprep.subr.mxu0 0.0
    %1502 = vmatpush1.msra.mxu0 %v112
    %1503 = vmatprep.subr.mxu0 0.0
    %1504 = vmatpush1.msra.mxu0 %v115
    %1505 = vmatprep.subr.mxu0 0.0
    %1506 = vmatpush1.msra.mxu0 %v118
    %1507 = vmatprep.subr.mxu0 0.0
    %1508 = vmatpush1.msra.mxu0 0.0
    %1509 = vmatprep.subr.mxu0 0.0
    %1510 = vmatpush1.msra.mxu0 0.0
    %1511 = vmatprep.subr.mxu0 0.0
    %1512 = vmatpush1.msra.mxu0 0.0
    %1513 = vmatprep.subr.mxu0 0.0
    %1514 = vmatpush1.msra.mxu0 0.0
    %1515 = vmatprep.subr.mxu0 0.0
    %1516 = vmatpush1.msra.mxu0 0.0
    %1517 = vmatprep.subr.mxu0 0.0
    %1518 = vmatpush1.msra.mxu0 0.0
    %1519 = vmatprep.subr.mxu0 0.0
    %1520 = vmatpush1.msra.mxu0 0.0
    %1521 = vmatprep.subr.mxu0 0.0
    %1522 = vmatpush1.msra.mxu0 0.0
    %1523 = vmatprep.subr.mxu0 0.0
    %1524 = vmatpush1.msra.mxu0 0.0
    %1525 = vmatprep.subr.mxu0 0.0
    %1526 = vmatpush1.msra.mxu0 0.0
    %1527 = vmatprep.subr.mxu0 0.0
    %1528 = vmatpush1.msra.mxu0 0.0
    %1529 = vmatprep.subr.mxu0 0.0
    %1530 = vmatpush1.msra.mxu0 0.0
    %1531 = vmatprep.subr.mxu0 0.0
    %1532 = vmatpush1.msra.mxu0 0.0
    %1533 = vmatprep.subr.mxu0 0.0
    %1534 = vmatpush1.msra.mxu0 0.0
    %1535 = vmatprep.subr.mxu0 0.0
    %1536 = vmatpush1.msra.mxu0 0.0
    %1537 = vmatprep.subr.mxu0 0.0
    %1538 = vmatpush1.msra.mxu0 0.0
    %1539 = vmatprep.subr.mxu0 0.0
    %1540 = vmatpush1.msra.mxu0 0.0
    %1541 = vmatprep.subr.mxu0 0.0
    %1542 = vmatpush1.msra.mxu0 0.0
    %1543 = vmatprep.subr.mxu0 0.0
    %1544 = vmatpush1.msra.mxu0 0.0
    %1545 = vmatprep.subr.mxu0 0.0
    %1546 = vmatpush1.msra.mxu0 0.0
    %1547 = vmatprep.subr.mxu0 0.0
    %1548 = vmatpush1.msra.mxu0 0.0
    %1549 = vmatprep.subr.mxu0 0.0
    %1550 = vmatpush1.msra.mxu0 0.0
    %1551 = vmatprep.subr.mxu0 0.0
    %1552 = vmatpush1.msra.mxu0 0.0
    %1553 = vmatprep.subr.mxu0 0.0
    %1554 = vmatpush1.msra.mxu0 0.0
    %1555 = vmatprep.subr.mxu0 0.0
    %1556 = vmatpush1.msra.mxu0 0.0
    %1557 = vmatprep.subr.mxu0 0.0
    %1558 = vmatpush1.msra.mxu0 0.0
    %1559 = vmatprep.subr.mxu0 0.0
    %1560 = vmatpush1.msra.mxu0 0.0
    %1561 = vmatprep.subr.mxu0 0.0
    %1562 = vmatpush1.msra.mxu0 0.0
    %1563 = vmatprep.mubr.f32.mxu0 0.0
    %1564 = vmatmul.mubr.f32.gmra.mrb[0].mxu0 %v1418
    %v1565 = vpop.f32.mrb[0].mxu0
    %v1566 = vadd.f32 0.0, %v1565
    %v1567 = vpop.f32.mrb[0].mxu0
    %1568 = vmatprep.mubr.f32.mxu0 0.0
    %1569 = vmatmul.mubr.f32.gmra.mrb[0].mxu0 %v1420
    %v1570 = vpop.f32.mrb[0].mxu0
    %v1571 = vadd.f32 0.0, %v1570
    %v1572 = vpop.f32.mrb[0].mxu0
    %1573 = vdwg.mxu0
    %1574 = vmatprep.subr.mxu0 0.0
    %1575 = vmatpush1.msra.mxu0 %v1491
    %1576 = vmatprep.subr.mxu0 0.0
    %1577 = vmatpush1.msra.mxu0 %v1497
    %1578 = vmatprep.subr.mxu0 0.0
    %1579 = vmatpush1.msra.mxu0 0.0
    %1580 = vmatprep.subr.mxu0 0.0
    %1581 = vmatpush1.msra.mxu0 0.0
    %1582 = vmatprep.subr.mxu0 0.0
    %1583 = vmatpush1.msra.mxu0 0.0
    %1584 = vmatprep.subr.mxu0 0.0
    %1585 = vmatpush1.msra.mxu0 0.0
    %1586 = vmatprep.subr.mxu0 0.0
    %1587 = vmatpush1.msra.mxu0 0.0
    %1588 = vmatprep.subr.mxu0 0.0
    %1589 = vmatpush1.msra.mxu0 0.0
    %1590 = vmatprep.subr.mxu0 0.0
    %1591 = vmatpush1.msra.mxu0 0.0
    %1592 = vmatprep.subr.mxu0 0.0
    %1593 = vmatpush1.msra.mxu0 0.0
    %1594 = vmatprep.subr.mxu0 0.0
    %1595 = vmatpush1.msra.mxu0 0.0
    %1596 = vmatprep.subr.mxu0 0.0
    %1597 = vmatpush1.msra.mxu0 0.0
    %1598 = vmatprep.subr.mxu0 0.0
    %1599 = vmatpush1.msra.mxu0 0.0
    %1600 = vmatprep.subr.mxu0 0.0
    %1601 = vmatpush1.msra.mxu0 0.0
    %1602 = vmatprep.subr.mxu0 0.0
    %1603 = vmatpush1.msra.mxu0 0.0
    %1604 = vmatprep.subr.mxu0 0.0
    %1605 = vmatpush1.msra.mxu0 0.0
    %1606 = vmatprep.subr.mxu0 0.0
    %1607 = vmatpush1.msra.mxu0 0.0
    %1608 = vmatprep.subr.mxu0 0.0
    %1609 = vmatpush1.msra.mxu0 0.0
    %1610 = vmatprep.subr.mxu0 0.0
    %1611 = vmatpush1.msra.mxu0 0.0
    %1612 = vmatprep.subr.mxu0 0.0
    %1613 = vmatpush1.msra.mxu0 0.0
    %1614 = vmatprep.subr.mxu0 0.0
    %1615 = vmatpush1.msra.mxu0 0.0
    %1616 = vmatprep.subr.mxu0 0.0
    %1617 = vmatpush1.msra.mxu0 0.0
    %1618 = vmatprep.subr.mxu0 0.0
    %1619 = vmatpush1.msra.mxu0 0.0
    %1620 = vmatprep.subr.mxu0 0.0
    %1621 = vmatpush1.msra.mxu0 0.0
    %1622 = vmatprep.subr.mxu0 0.0
    %1623 = vmatpush1.msra.mxu0 0.0
    %1624 = vmatprep.subr.mxu0 0.0
    %1625 = vmatpush1.msra.mxu0 0.0
    %1626 = vmatprep.subr.mxu0 0.0
    %1627 = vmatpush1.msra.mxu0 0.0
    %1628 = vmatprep.subr.mxu0 0.0
    %1629 = vmatpush1.msra.mxu0 0.0
    %1630 = vmatprep.subr.mxu0 0.0
    %1631 = vmatpush1.msra.mxu0 0.0
    %1632 = vmatprep.subr.mxu0 0.0
    %1633 = vmatpush1.msra.mxu0 0.0
    %1634 = vmatprep.subr.mxu0 0.0
    %1635 = vmatpush1.msra.mxu0 0.0
    %1636 = vmatprep.subr.mxu0 0.0
    %1637 = vmatpush1.msra.mxu0 0.0
    %1638 = vmatprep.mubr.f32.mxu0 0.0
    %1639 = vmatmul.mubr.f32.gmra.mrb[0].mxu0 %v303
    %v1640 = vpop.f32.mrb[0].mxu0
    %v1641 = vadd.f32 0.0, %v1640
    %v1642 = vpop.f32.mrb[0].mxu0
    %1643 = vmatprep.mubr.f32.mxu0 0.0
    %1644 = vmatmul.mubr.f32.gmra.mrb[0].mxu0 %v306
    %v1645 = vpop.f32.mrb[0].mxu0
    %v1646 = vadd.f32 0.0, %v1645
    %v1647 = vpop.f32.mrb[0].mxu0
    %1648 = vdwg.mxu0
    %1649 = vmatprep.subr.mxu0 0.0
    %1650 = vmatpush1.msra.mxu0 %v1489
    %1651 = vmatprep.subr.mxu0 0.0
    %1652 = vmatpush1.msra.mxu0 %v1495
    %1653 = vmatprep.subr.mxu0 0.0
    %1654 = vmatpush1.msra.mxu0 0.0
    %1655 = vmatprep.subr.mxu0 0.0
    %1656 = vmatpush1.msra.mxu0 0.0
    %1657 = vmatprep.subr.mxu0 0.0
    %1658 = vmatpush1.msra.mxu0 0.0
    %1659 = vmatprep.subr.mxu0 0.0
    %1660 = vmatpush1.msra.mxu0 0.0
    %1661 = vmatprep.subr.mxu0 0.0
    %1662 = vmatpush1.msra.mxu0 0.0
    %1663 = vmatprep.subr.mxu0 0.0
    %1664 = vmatpush1.msra.mxu0 0.0
    %1665 = vmatprep.subr.mxu0 0.0
    %1666 = vmatpush1.msra.mxu0 0.0
    %1667 = vmatprep.subr.mxu0 0.0
    %1668 = vmatpush1.msra.mxu0 0.0
    %1669 = vmatprep.subr.mxu0 0.0
    %1670 = vmatpush1.msra.mxu0 0.0
    %1671 = vmatprep.subr.mxu0 0.0
    %1672 = vmatpush1.msra.mxu0 0.0
    %1673 = vmatprep.subr.mxu0 0.0
    %1674 = vmatpush1.msra.mxu0 0.0
    %1675 = vmatprep.subr.mxu0 0.0
    %1676 = vmatpush1.msra.mxu0 0.0
    %1677 = vmatprep.subr.mxu0 0.0
    %1678 = vmatpush1.msra.mxu0 0.0
    %1679 = vmatprep.subr.mxu0 0.0
    %1680 = vmatpush1.msra.mxu0 0.0
    %1681 = vmatprep.subr.mxu0 0.0
    %1682 = vmatpush1.msra.mxu0 0.0
    %1683 = vmatprep.subr.mxu0 0.0
    %1684 = vmatpush1.msra.mxu0 0.0
    %1685 = vmatprep.subr.mxu0 0.0
    %1686 = vmatpush1.msra.mxu0 0.0
    %1687 = vmatprep.subr.mxu0 0.0
    %1688 = vmatpush1.msra.mxu0 0.0
    %1689 = vmatprep.subr.mxu0 0.0
    %1690 = vmatpush1.msra.mxu0 0.0
    %1691 = vmatprep.subr.mxu0 0.0
    %1692 = vmatpush1.msra.mxu0 0.0
    %1693 = vmatprep.subr.mxu0 0.0
    %1694 = vmatpush1.msra.mxu0 0.0
    %1695 = vmatprep.subr.mxu0 0.0
    %1696 = vmatpush1.msra.mxu0 0.0
    %1697 = vmatprep.subr.mxu0 0.0
    %1698 = vmatpush1.msra.mxu0 0.0
    %1699 = vmatprep.subr.mxu0 0.0
    %1700 = vmatpush1.msra.mxu0 0.0
    %1701 = vmatprep.subr.mxu0 0.0
    %1702 = vmatpush1.msra.mxu0 0.0
    %1703 = vmatprep.subr.mxu0 0.0
    %1704 = vmatpush1.msra.mxu0 0.0
    %1705 = vmatprep.subr.mxu0 0.0
    %1706 = vmatpush1.msra.mxu0 0.0
    %1707 = vmatprep.subr.mxu0 0.0
    %1708 = vmatpush1.msra.mxu0 0.0
    %1709 = vmatprep.subr.mxu0 0.0
    %1710 = vmatpush1.msra.mxu0 0.0
    %1711 = vmatprep.subr.mxu0 0.0
    %1712 = vmatpush1.msra.mxu0 0.0
    %1713 = vmatprep.mubr.f32.mxu0 0.0
    %1714 = vmatmul.mubr.f32.gmra.mrb[0].mxu0 %v384
    %v1715 = vpop.f32.mrb[0].mxu0
    %v1716 = vadd.f32 %v1641, %v1715
    %v1717 = vpop.f32.mrb[0].mxu0
    %1718 = vmatprep.mubr.f32.mxu0 0.0
    %1719 = vmatmul.mubr.f32.gmra.mrb[0].mxu0 %v387
    %v1720 = vpop.f32.mrb[0].mxu0
    %v1721 = vadd.f32 %v1646, %v1720
    %v1722 = vpop.f32.mrb[0].mxu0
    %1723 = vdwg.mxu0
    %1724 = vmatprep.subr.mxu0 0.0
    %1725 = vmatpush1.msra.mxu0 %v1566
    %1726 = vmatprep.subr.mxu0 0.0
    %1727 = vmatpush1.msra.mxu0 %v1571
    %1728 = vmatprep.subr.mxu0 0.0
    %1729 = vmatpush1.msra.mxu0 0.0
    %1730 = vmatprep.subr.mxu0 0.0
    %1731 = vmatpush1.msra.mxu0 0.0
    %1732 = vmatprep.subr.mxu0 0.0
    %1733 = vmatpush1.msra.mxu0 0.0
    %1734 = vmatprep.subr.mxu0 0.0
    %1735 = vmatpush1.msra.mxu0 0.0
    %1736 = vmatprep.subr.mxu0 0.0
    %1737 = vmatpush1.msra.mxu0 0.0
    %1738 = vmatprep.subr.mxu0 0.0
    %1739 = vmatpush1.msra.mxu0 0.0
    %1740 = vmatprep.subr.mxu0 0.0
    %1741 = vmatpush1.msra.mxu0 0.0
    %1742 = vmatprep.subr.mxu0 0.0
    %1743 = vmatpush1.msra.mxu0 0.0
    %1744 = vmatprep.subr.mxu0 0.0
    %1745 = vmatpush1.msra.mxu0 0.0
    %1746 = vmatprep.subr.mxu0 0.0
    %1747 = vmatpush1.msra.mxu0 0.0
    %1748 = vmatprep.subr.mxu0 0.0
    %1749 = vmatpush1.msra.mxu0 0.0
    %1750 = vmatprep.subr.mxu0 0.0
    %1751 = vmatpush1.msra.mxu0 0.0
    %1752 = vmatprep.subr.mxu0 0.0
    %1753 = vmatpush1.msra.mxu0 0.0
    %1754 = vmatprep.subr.mxu0 0.0
    %1755 = vmatpush1.msra.mxu0 0.0
    %1756 = vmatprep.subr.mxu0 0.0
    %1757 = vmatpush1.msra.mxu0 0.0
    %1758 = vmatprep.subr.mxu0 0.0
    %1759 = vmatpush1.msra.mxu0 0.0
    %1760 = vmatprep.subr.mxu0 0.0
    %1761 = vmatpush1.msra.mxu0 0.0
    %1762 = vmatprep.subr.mxu0 0.0
    %1763 = vmatpush1.msra.mxu0 0.0
    %1764 = vmatprep.subr.mxu0 0.0
    %1765 = vmatpush1.msra.mxu0 0.0
    %1766 = vmatprep.subr.mxu0 0.0
    %1767 = vmatpush1.msra.mxu0 0.0
    %1768 = vmatprep.subr.mxu0 0.0
    %1769 = vmatpush1.msra.mxu0 0.0
    %1770 = vmatprep.subr.mxu0 0.0
    %1771 = vmatpush1.msra.mxu0 0.0
    %1772 = vmatprep.subr.mxu0 0.0
    %1773 = vmatpush1.msra.mxu0 0.0
    %1774 = vmatprep.subr.mxu0 0.0
    %1775 = vmatpush1.msra.mxu0 0.0
    %1776 = vmatprep.subr.mxu0 0.0
    %1777 = vmatpush1.msra.mxu0 0.0
    %1778 = vmatprep.subr.mxu0 0.0
    %1779 = vmatpush1.msra.mxu0 0.0
    %1780 = vmatprep.subr.mxu0 0.0
    %1781 = vmatpush1.msra.mxu0 0.0
    %1782 = vmatprep.subr.mxu0 0.0
    %1783 = vmatpush1.msra.mxu0 0.0
    %1784 = vmatprep.subr.mxu0 0.0
    %1785 = vmatpush1.msra.mxu0 0.0
    %1786 = vmatprep.subr.mxu0 0.0
    %1787 = vmatpush1.msra.mxu0 0.0
    %1788 = vmatprep.mubr.f32.mxu0 0.0
    %1789 = vmatmul.mubr.f32.gmra.mrb[0].mxu0 %v465
    %v1790 = vpop.f32.mrb[0].mxu0
    %v1791 = vadd.f32 0.0, %v1790
    %v1792 = vpop.f32.mrb[0].mxu0
    %1793 = vmatprep.mubr.f32.mxu0 0.0
    %1794 = vmatmul.mubr.f32.gmra.mrb[0].mxu0 %v468
    %v1795 = vpop.f32.mrb[0].mxu0
    %v1796 = vadd.f32 0.0, %v1795
    %v1797 = vpop.f32.mrb[0].mxu0
    %1798 = vdwg.mxu0
    %v1799 = vadd.f32 %v1716, %v1791
    %v1800 = vadd.f32 %v1721, %v1796
    %1803 = vrot.lane.b32.xlu0 %v1799, 64
    %v1804 = vpop.permute.xlu0 %1803
    %1805 = vrot.lane.b32.xlu0 %v1800, 64
    %v1806 = vpop.permute.xlu0 %1805
    %v1809 = vadd.f32 %v1388, %v1804
    %v1810 = vadd.f32 %v1389, %v1806
    %v1811 = vtanh.pop %v1809
    %v1812 = vtanh.pop %v1810
    %1815 = vrot.lane.b32.xlu0 %v1811, 64
    %v1816 = vpop.permute.xlu0 %1815
    %1817 = vrot.lane.b32.xlu0 %v1812, 64
    %v1818 = vpop.permute.xlu0 %1817
    %v1821 = vmul.f32 %v1399, %v1816
    %v1822 = vmul.f32 %v1401, %v1818
    %v1823 = vsub.f32 1.0, %v1399
    %v1824 = vsub.f32 1.0, %v1401
    %v1825 = vmul.f32 %v1823, %v1001
    %v1826 = vmul.f32 %v1824, %v1002
    %v1827 = vadd.f32 %v1821, %v1825
    %v1828 = vadd.f32 %v1822, %v1826
    %s1829 = scalar_lea.vmem [#allocation11], 16
    %1830 = vst.msk [vmem:[%s1829] sm:$0xff] %vm583, %v1827
    %1831 = vst.msk [vmem:[%s1829 + $0x8] sm:$0xff] %vm583, %v1828
    // Predicated region
    $region46: #{tpu_custom_call.1} parent=1 // pred_check
      _
    $region47: #{tpu_custom_call.1} parent=1 // pred_check_branch
      %1833 = sbr.rel (0) target = $region49
    $region48: #{tpu_custom_call.1} parent=1 // pred_region
      %s1835 = ssub.s32 512, 512
      %1836 = vsyncadd [#allocation4], %s1835
      %s1837 = sshll.u32 [#allocation11], 4
      %s1838 = int_to_ptr.vmem [resolvable:$true] %s1837
      %1843 = dma.vmem_to_hbm [thread:$0]  %s1838, 512, %s6, [#allocation4], 128, 128, 8
    $region49: #{tpu_custom_call.1} parent=1 // pred_fallthru
      _
    // Predicated region
    $region50: #{tpu_custom_call.1} parent=1 // pred_check
      _
    $region51: #{tpu_custom_call.1} parent=1 // pred_check_branch
      %1845 = sbr.rel (0) target = $region53
    $region52: #{tpu_custom_call.1} parent=1 // pred_region
      %1846 = dma.done [#allocation4], 512
    $region53: #{tpu_custom_call.1} parent=1 // pred_fallthru
      _
    %1847 = vsyncpa [#allocation3], 1
    %1848 = vsyncpa [#allocation6], 1
    %1849 = vsyncpa [#allocation9], 1
    %1850 = vsyncpa [#allocation4], 1

</llo_original>
